<compile_context>
chip_gen: v6e
topology: v6e:2x2x1
jax: 0.10.0
libtpu: 0.0.40
codegen_flags: <defaults>
</compile_context>

<pallas_src>
import functools
import math

import jax
import jax.numpy as jnp
import numpy as np
from jax import lax
from jax.experimental import pallas as pl
from jax.experimental.pallas import tpu as pltpu

LN_EPS = 1e-5  # nn.LayerNorm default


def _layer_norm(v, g, b):
    mu = jnp.mean(v, axis=-1, keepdims=True)
    var = jnp.mean((v - mu) ** 2, axis=-1, keepdims=True)
    return (v - mu) * lax.rsqrt(var + LN_EPS) * g + b


def encoder_layer_kernel(x_ref,
                         wqkv_ref, bqkv_ref,        # (D, Wqkv) bf16 (Q cols pre-scaled), (1, Wqkv) f32
                         wo_ref, bo_ref,            # (H*d_v, D) bf16, (1, D) f32
                         ln1_g_ref, ln1_b_ref,      # (1, D) f32
                         w1_ref, b1_ref, w2_ref, b2_ref,
                         ln2_g_ref, ln2_b_ref,
                         out_ref, attn_ref,
                         qkv_scr, ctx_scr,
                         *, n_head, d_k, d_v, tq):
    bf16 = jnp.bfloat16
    f32 = jnp.float32
    qi = pl.program_id(1)
    q_start = pl.multiple_of(qi * tq, tq)
    k_off = n_head * d_k
    v_off = 2 * n_head * d_k

    # ---- Once per batch element: fused QKV projection for all S rows -> resident scratch ----
    @pl.when(qi == 0)
    def _():
        x_all = x_ref[0]                                              # (S, D) f32
        xn = _layer_norm(x_all, ln1_g_ref[0], ln1_b_ref[0])
        qkv = jnp.dot(xn.astype(bf16), wqkv_ref[...],
                      preferred_element_type=f32) + bqkv_ref[0]       # (S, Wqkv) f32 acc
        qkv_scr[...] = qkv.astype(bf16)

    x_q = x_ref[0, pl.ds(q_start, tq), :]                             # (TQ, D) f32 residual
    slab_q = qkv_scr[pl.ds(q_start, tq), :]                           # (TQ, Wqkv) bf16

    # ---- Per-head attention (n_head is small & static -> unrolled) ----
    for h in range(n_head):
        q_h = slab_q[:, h * d_k:(h + 1) * d_k]                        # (TQ, d_k) bf16, pre-scaled
        k_h = qkv_scr[:, k_off + h * d_k: k_off + (h + 1) * d_k]      # (S, d_k) bf16
        v_h = qkv_scr[:, v_off + h * d_v: v_off + (h + 1) * d_v]      # (S, d_v) bf16

        s = jnp.einsum("qd,kd->qk", q_h, k_h,
                       preferred_element_type=f32)                    # (TQ, S) f32
        s = s - jnp.max(s, axis=-1, keepdims=True)
        p = jnp.exp(s)
        denom = jnp.sum(p, axis=-1, keepdims=True)
        p16 = (p * pl.reciprocal(denom, approx=True)).astype(bf16)    # softmax, bf16

        attn_ref[0, h] = p16.astype(attn_ref.dtype)                   # bf16 attn output
        ctx_scr[:, h * d_v:(h + 1) * d_v] = jnp.dot(
            p16, v_h, preferred_element_type=f32).astype(bf16)        # (TQ, d_v)

    # ---- Output projection + residual (dropout == identity in eval) ----
    attn_out = jnp.dot(ctx_scr[...], wo_ref[...],
                       preferred_element_type=f32) + bo_ref[0]        # (TQ, D) f32
    x1 = attn_out + x_q

    # ---- Position-wise FFN (pre-LN) ----
    yn = _layer_norm(x1, ln2_g_ref[0], ln2_b_ref[0])
    h1 = jnp.dot(yn.astype(bf16), w1_ref[...], preferred_element_type=f32) + b1_ref[0]
    h1 = jnp.maximum(h1, 0.0)
    h2 = jnp.dot(h1.astype(bf16), w2_ref[...], preferred_element_type=f32) + b2_ref[0]
    out_ref[0] = (h2 + x1).astype(out_ref.dtype)


def encoder_layer(x, params, *, n_head, d_k, d_v, q_tile=None, attn_dtype=jnp.bfloat16):
    """params follow the PyTorch layout: wq/wk/wv (D, H*dk), wo (H*dv, D), biases (1, n)."""
    B, S, D = x.shape
    f32, bf16 = jnp.float32, jnp.bfloat16
    scale = 1.0 / math.sqrt(d_k)

    # Query-tile size: lane/sublane friendly; fall back to full S for awkward sizes.
    if q_tile is None:
        q_tile = 128 if S % 128 == 0 else S
    assert S % q_tile == 0, "q_tile must divide S"
    assert q_tile == S or q_tile % 8 == 0, "q_tile must be a multiple of 8 (or the full S)"
    n_qt = S // q_tile

    # Host-side layout plumbing: one packed bf16 QKV weight; 1/sqrt(d_k) folded into Q columns.
    wqkv = jnp.concatenate([params["wq"] * scale, params["wk"], params["wv"]],
                           axis=1).astype(bf16)                       # (D, H*(2dk+dv))
    bqkv = jnp.concatenate([params["bq"] * scale, params["bk"], params["bv"]],
                           axis=1).astype(f32)                        # (1, H*(2dk+dv))
    w_qkv = wqkv.shape[1]
    wo = params["wo"].astype(bf16)                                    # (H*d_v, D)
    bo = params["bo"].reshape(1, D).astype(f32)
    w1 = params["w1"].astype(bf16)
    b1 = params["b1"].reshape(1, -1).astype(f32)
    w2 = params["w2"].astype(bf16)
    b2 = params["b2"].reshape(1, -1).astype(f32)
    ln1_g = params["ln1_g"].reshape(1, D).astype(f32)
    ln1_b = params["ln1_b"].reshape(1, D).astype(f32)
    ln2_g = params["ln2_g"].reshape(1, D).astype(f32)
    ln2_b = params["ln2_b"].reshape(1, D).astype(f32)

    weights = [wqkv, bqkv, wo, bo, ln1_g, ln1_b, w1, b1, w2, b2, ln2_g, ln2_b]

    def w_spec(p):
        nd = p.ndim
        # Constant index_map across the grid -> the block stays resident; no re-DMA per step.
        return pl.BlockSpec(p.shape, lambda b, q, _nd=nd: (0,) * _nd)

    in_specs = [pl.BlockSpec((1, S, D), lambda b, q: (b, 0, 0))] + [w_spec(p) for p in weights]
    out_specs = [
        pl.BlockSpec((1, q_tile, D), lambda b, q: (b, q, 0)),
        pl.BlockSpec((1, n_head, q_tile, S), lambda b, q: (b, 0, q, 0)),
    ]
    out_shape = [
        jax.ShapeDtypeStruct((B, S, D), x.dtype),
        jax.ShapeDtypeStruct((B, n_head, S, S), attn_dtype),
    ]
    scratch_shapes = [
        pltpu.VMEM((S, w_qkv), bf16),               # resident packed Q/K/V activations
        pltpu.VMEM((q_tile, n_head * d_v), bf16),   # per-tile concat of head contexts
    ]

    # Generation-dispatched VMEM budget: ~75% of physical (96 MiB v5e/v6e, 48 MiB v7x).
    try:
        vmem_cap = pltpu.get_tpu_info().vmem_capacity_bytes
    except Exception:
        vmem_cap = 64 * 1024 * 1024
    vmem_limit = min((int(vmem_cap) * 3) // 4, 100 * 1024 * 1024)

    kernel = functools.partial(encoder_layer_kernel,
                               n_head=n_head, d_k=d_k, d_v=d_v, tq=q_tile)
    return pl.pallas_call(
        kernel,
        out_shape=out_shape,
        grid_spec=pltpu.PrefetchScalarGridSpec(
            num_scalar_prefetch=0,
            grid=(B, n_qt),
            in_specs=in_specs,
            out_specs=out_specs,
            scratch_shapes=scratch_shapes,
        ),
        compiler_params=pltpu.CompilerParams(
            # Batch axis feeds megacore / both v7x TensorCores; the q-tile axis must stay
            # "arbitrary" because the QKV slab is computed once per batch element at q-tile 0.
            dimension_semantics=("parallel", "arbitrary"),
            vmem_limit_bytes=vmem_limit,
        ),
    )(x, *weights)


def _reference(x, p, n_head, d_k, d_v):
    # Pure-JAX f32 reference of the same forward pass (numerical sanity check).
    B, S, D = x.shape
    xn = _layer_norm(x, p["ln1_g"][0], p["ln1_b"][0])
    q = xn @ p["wq"] + p["bq"][0]
    k = xn @ p["wk"] + p["bk"][0]
    v = xn @ p["wv"] + p["bv"][0]
    q = q.reshape(B, S, n_head, d_k).transpose(0, 2, 1, 3)
    k = k.reshape(B, S, n_head, d_k).transpose(0, 2, 1, 3)
    v = v.reshape(B, S, n_head, d_v).transpose(0, 2, 1, 3)
    scores = jnp.einsum("bhqd,bhkd->bhqk", q, k) / math.sqrt(d_k)
    attn = jax.nn.softmax(scores, axis=-1)
    o = jnp.einsum("bhqk,bhkd->bhqd", attn, v).transpose(0, 2, 1, 3).reshape(B, S, n_head * d_v)
    x1 = o @ p["wo"] + p["bo"][0] + x
    yn = _layer_norm(x1, p["ln2_g"][0], p["ln2_b"][0])
    out = jnp.maximum(yn @ p["w1"] + p["b1"][0], 0.0) @ p["w2"] + p["b2"][0] + x1
    return out, attn


if __name__ == "__main__":
    d_model, d_inner, n_head, d_k, d_v = 32, 64, 2, 16, 16

    key = jax.random.PRNGKey(0)
    ks = jax.random.split(key, 16)
    f32 = jnp.float32

    def lin(k, fan_in, fan_out):
        return jax.random.normal(k, (fan_in, fan_out), f32) / math.sqrt(fan_in)

    def vec(k, n):
        return 0.1 * jax.random.normal(k, (1, n), f32)

    params = {
        "wq": lin(ks[1], d_model, n_head * d_k), "bq": vec(ks[2], n_head * d_k),
        "wk": lin(ks[3], d_model, n_head * d_k), "bk": vec(ks[4], n_head * d_k),
        "wv": lin(ks[5], d_model, n_head * d_v), "bv": vec(ks[6], n_head * d_v),
        "wo": lin(ks[7], n_head * d_v, d_model), "bo": vec(ks[8], d_model),
        "ln1_g": jnp.ones((1, d_model), f32), "ln1_b": jnp.zeros((1, d_model), f32),
        "w1": lin(ks[9], d_model, d_inner), "b1": vec(ks[10], d_inner),
        "w2": lin(ks[11], d_inner, d_model), "b2": vec(ks[12], d_model),
        "ln2_g": jnp.ones((1, d_model), f32), "ln2_b": jnp.zeros((1, d_model), f32),
    }

    def check(B, S, q_tile):
        x = jax.random.normal(jax.random.fold_in(key, S), (B, S, d_model), f32)
        enc_out, enc_attn = encoder_layer(x, params, n_head=n_head, d_k=d_k, d_v=d_v,
                                          q_tile=q_tile)
        jax.block_until_ready((enc_out, enc_attn))
        ref_out, ref_attn = _reference(x, params, n_head, d_k, d_v)
        # Tolerances sized for bf16 MXU operands / bf16 attention output vs. an all-f32 reference.
        np.testing.assert_allclose(np.asarray(enc_attn.astype(f32)), np.asarray(ref_attn),
                                   rtol=2e-2, atol=2e-2)
        np.testing.assert_allclose(np.asarray(enc_out), np.asarray(ref_out),
                                   rtol=5e-2, atol=1e-1)

    check(B=2, S=8, q_tile=None)   # single q-tile (degenerates to full block)
    check(B=2, S=16, q_tile=8)     # exercises the query-tiled path + resident QKV slab reuse
    print("KERNEL_OK")
</pallas_src>

<mosaic_0001>
module attributes {stable_mosaic.version = 11 : i64} {
  func.func @encoder_layer_kernel(%arg0: i32, %arg1: i32, %arg2: memref<1x8x32xf32, #tpu.memory_space<vmem>>, %arg3: memref<32x96xbf16, #tpu.memory_space<vmem>>, %arg4: memref<1x96xf32, #tpu.memory_space<vmem>>, %arg5: memref<32x32xbf16, #tpu.memory_space<vmem>>, %arg6: memref<1x32xf32, #tpu.memory_space<vmem>>, %arg7: memref<1x32xf32, #tpu.memory_space<vmem>>, %arg8: memref<1x32xf32, #tpu.memory_space<vmem>>, %arg9: memref<32x64xbf16, #tpu.memory_space<vmem>>, %arg10: memref<1x64xf32, #tpu.memory_space<vmem>>, %arg11: memref<64x32xbf16, #tpu.memory_space<vmem>>, %arg12: memref<1x32xf32, #tpu.memory_space<vmem>>, %arg13: memref<1x32xf32, #tpu.memory_space<vmem>>, %arg14: memref<1x32xf32, #tpu.memory_space<vmem>>, %arg15: memref<1x8x32xf32, #tpu.memory_space<vmem>>, %arg16: memref<1x2x8x8xbf16, #tpu.memory_space<vmem>>, %arg17: memref<8x96xbf16, #tpu.memory_space<vmem>>, %arg18: memref<8x32xbf16, #tpu.memory_space<vmem>>) attributes {dimension_semantics = [#tpu.dimension_semantics<parallel>, #tpu.dimension_semantics<arbitrary>], iteration_bounds = array<i64: 2, 1>, scalar_prefetch = 0 : i64, scratch_operands = 2 : i64, tpu.core_type = #tpu.core_type<tc>, window_params = [{transform_indices = @transform_0, window_bounds = array<i64: 1, 8, 32>}, {pipeline_mode = #tpu.pipeline_mode<synchronous>, transform_indices = @transform_1, window_bounds = array<i64: 32, 96>}, {pipeline_mode = #tpu.pipeline_mode<synchronous>, transform_indices = @transform_2, window_bounds = array<i64: 1, 96>}, {pipeline_mode = #tpu.pipeline_mode<synchronous>, transform_indices = @transform_3, window_bounds = array<i64: 32, 32>}, {pipeline_mode = #tpu.pipeline_mode<synchronous>, transform_indices = @transform_4, window_bounds = array<i64: 1, 32>}, {pipeline_mode = #tpu.pipeline_mode<synchronous>, transform_indices = @transform_5, window_bounds = array<i64: 1, 32>}, {pipeline_mode = #tpu.pipeline_mode<synchronous>, transform_indices = @transform_6, window_bounds = array<i64: 1, 32>}, {pipeline_mode = #tpu.pipeline_mode<synchronous>, transform_indices = @transform_7, window_bounds = array<i64: 32, 64>}, {pipeline_mode = #tpu.pipeline_mode<synchronous>, transform_indices = @transform_8, window_bounds = array<i64: 1, 64>}, {pipeline_mode = #tpu.pipeline_mode<synchronous>, transform_indices = @transform_9, window_bounds = array<i64: 64, 32>}, {pipeline_mode = #tpu.pipeline_mode<synchronous>, transform_indices = @transform_10, window_bounds = array<i64: 1, 32>}, {pipeline_mode = #tpu.pipeline_mode<synchronous>, transform_indices = @transform_11, window_bounds = array<i64: 1, 32>}, {pipeline_mode = #tpu.pipeline_mode<synchronous>, transform_indices = @transform_12, window_bounds = array<i64: 1, 32>}, {transform_indices = @transform_13, window_bounds = array<i64: 1, 8, 32>}, {transform_indices = @transform_14, window_bounds = array<i64: 1, 2, 8, 8>}]} {
    %c8_i32 = arith.constant 8 : i32
    %0 = arith.muli %arg1, %c8_i32 : i32
    %1 = tpu.assume_multiple %0, 8 : i32
    %c0_i32 = arith.constant 0 : i32
    %2 = arith.cmpi eq, %arg1, %c0_i32 : i32
    %3 = arith.extui %2 : i1 to i32
    %c0_i32_0 = arith.constant 0 : i32
    %4 = arith.cmpi ne, %3, %c0_i32_0 : i32
    scf.if %4 {
      %c0_54 = arith.constant 0 : index
      %c0_55 = arith.constant 0 : index
      %c0_56 = arith.constant 0 : index
      %111 = vector.load %arg2[%c0_54, %c0_55, %c0_56] : memref<1x8x32xf32, #tpu.memory_space<vmem>>, vector<1x8x32xf32>
      %112 = vector.shape_cast %111 : vector<1x8x32xf32> to vector<8x32xf32>
      %c0_57 = arith.constant 0 : index
      %c0_58 = arith.constant 0 : index
      %113 = vector.load %arg7[%c0_57, %c0_58] : memref<1x32xf32, #tpu.memory_space<vmem>>, vector<1x32xf32>
      %114 = vector.shape_cast %113 : vector<1x32xf32> to vector<32xf32>
      %c0_59 = arith.constant 0 : index
      %c0_60 = arith.constant 0 : index
      %115 = vector.load %arg8[%c0_59, %c0_60] : memref<1x32xf32, #tpu.memory_space<vmem>>, vector<1x32xf32>
      %116 = vector.shape_cast %115 : vector<1x32xf32> to vector<32xf32>
      %cst_61 = arith.constant dense<0.000000e+00> : vector<8xf32>
      %117 = vector.multi_reduction <add>, %112, %cst_61 [1] : vector<8x32xf32> to vector<8xf32>
      %118 = vector.shape_cast %117 : vector<8xf32> to vector<8x1xf32>
      %cst_62 = arith.constant 3.200000e+01 : f32
      %119 = vector.broadcast %cst_62 : f32 to vector<8x1xf32>
      %120 = arith.divf %118, %119 : vector<8x1xf32>
      %121 = vector.broadcast %120 : vector<8x1xf32> to vector<8x32xf32>
      %122 = arith.subf %112, %121 : vector<8x32xf32>
      %123 = arith.mulf %122, %122 : vector<8x32xf32>
      %cst_63 = arith.constant dense<0.000000e+00> : vector<8xf32>
      %124 = vector.multi_reduction <add>, %123, %cst_63 [1] : vector<8x32xf32> to vector<8xf32>
      %125 = vector.shape_cast %124 : vector<8xf32> to vector<8x1xf32>
      %cst_64 = arith.constant 3.200000e+01 : f32
      %126 = vector.broadcast %cst_64 : f32 to vector<8x1xf32>
      %127 = arith.divf %125, %126 : vector<8x1xf32>
      %128 = vector.broadcast %120 : vector<8x1xf32> to vector<8x32xf32>
      %129 = arith.subf %112, %128 : vector<8x32xf32>
      %cst_65 = arith.constant 9.99999974E-6 : f32
      %130 = vector.broadcast %cst_65 : f32 to vector<8x1xf32>
      %131 = arith.addf %127, %130 : vector<8x1xf32>
      %132 = math.rsqrt %131 : vector<8x1xf32>
      %133 = vector.broadcast %132 : vector<8x1xf32> to vector<8x32xf32>
      %134 = arith.mulf %129, %133 : vector<8x32xf32>
      %135 = vector.shape_cast %114 : vector<32xf32> to vector<1x32xf32>
      %136 = vector.broadcast %135 : vector<1x32xf32> to vector<8x32xf32>
      %137 = arith.mulf %134, %136 : vector<8x32xf32>
      %138 = vector.shape_cast %116 : vector<32xf32> to vector<1x32xf32>
      %139 = vector.broadcast %138 : vector<1x32xf32> to vector<8x32xf32>
      %140 = arith.addf %137, %139 : vector<8x32xf32>
      %141 = arith.truncf %140 : vector<8x32xf32> to vector<8x32xbf16>
      %c0_66 = arith.constant 0 : index
      %c0_67 = arith.constant 0 : index
      %142 = vector.load %arg3[%c0_66, %c0_67] : memref<32x96xbf16, #tpu.memory_space<vmem>>, vector<32x96xbf16>
      %cst_68 = arith.constant dense<0.000000e+00> : vector<8x96xf32>
      %143 = tpu.matmul %141, %142, %cst_68 {dimension_numbers = #tpu.dot_dimension_numbers<[1], [0], [0], [1], [0, 0, 1, 1], [], []>} : vector<8x32xbf16>, vector<32x96xbf16>, vector<8x96xf32> -> vector<8x96xf32>
      %c0_69 = arith.constant 0 : index
      %c0_70 = arith.constant 0 : index
      %144 = vector.load %arg4[%c0_69, %c0_70] : memref<1x96xf32, #tpu.memory_space<vmem>>, vector<1x96xf32>
      %145 = vector.shape_cast %144 : vector<1x96xf32> to vector<96xf32>
      %146 = vector.shape_cast %145 : vector<96xf32> to vector<1x96xf32>
      %147 = vector.broadcast %146 : vector<1x96xf32> to vector<8x96xf32>
      %148 = arith.addf %143, %147 : vector<8x96xf32>
      %149 = arith.truncf %148 : vector<8x96xf32> to vector<8x96xbf16>
      %c0_71 = arith.constant 0 : index
      %c0_72 = arith.constant 0 : index
      %150 = vector.load %arg17[%c0_71, %c0_72] : memref<8x96xbf16, #tpu.memory_space<vmem>>, vector<8x96xbf16>
      tpu.vector_store %arg17[%c0_71, %c0_72], %149 {strides = array<i32>} : memref<8x96xbf16, #tpu.memory_space<vmem>>, vector<8x96xbf16>,
    } else {
    }
    %c0 = arith.constant 0 : index
    %5 = arith.index_cast %1 : i32 to index
    %c0_1 = arith.constant 0 : index
    %6 = vector.load %arg2[%c0, %5, %c0_1] : memref<1x8x32xf32, #tpu.memory_space<vmem>>, vector<1x8x32xf32>
    %7 = vector.shape_cast %6 : vector<1x8x32xf32> to vector<8x32xf32>
    %8 = arith.index_cast %1 : i32 to index
    %c0_2 = arith.constant 0 : index
    %9 = vector.load %arg17[%8, %c0_2] : memref<8x96xbf16, #tpu.memory_space<vmem>>, vector<8x96xbf16>
    %10 = vector.extract_strided_slice %9 {offsets = [0, 0], sizes = [8, 16], strides = [1, 1]} : vector<8x96xbf16> to vector<8x16xbf16>
    %c0_3 = arith.constant 0 : index
    %c32 = arith.constant 32 : index
    %11 = vector.load %arg17[%c0_3, %c32] : memref<8x96xbf16, #tpu.memory_space<vmem>>, vector<8x16xbf16>
    %c0_4 = arith.constant 0 : index
    %c64 = arith.constant 64 : index
    %12 = vector.load %arg17[%c0_4, %c64] : memref<8x96xbf16, #tpu.memory_space<vmem>>, vector<8x16xbf16>
    "tpu.trace_start"() <{level = 10 : i32, message = "qd,kd->qk"}> : () -> ()
    %cst = arith.constant dense<0.000000e+00> : vector<8x8xf32>
    %13 = tpu.matmul %10, %11, %cst {dimension_numbers = #tpu.dot_dimension_numbers<[1], [1], [0], [0], [0, 0, 1, 0], [], []>} : vector<8x16xbf16>, vector<8x16xbf16>, vector<8x8xf32> -> vector<8x8xf32>
    "tpu.trace_stop"() : () -> ()
    %cst_5 = arith.constant dense<0xFF800000> : vector<8xf32>
    %14 = vector.multi_reduction <maximumf>, %13, %cst_5 [1] : vector<8x8xf32> to vector<8xf32>
    %15 = vector.shape_cast %14 : vector<8xf32> to vector<8x1xf32>
    %16 = vector.broadcast %15 : vector<8x1xf32> to vector<8x8xf32>
    %17 = arith.subf %13, %16 : vector<8x8xf32>
    %18 = math.exp %17 : vector<8x8xf32>
    %cst_6 = arith.constant dense<0.000000e+00> : vector<8xf32>
    %19 = vector.multi_reduction <add>, %18, %cst_6 [1] : vector<8x8xf32> to vector<8xf32>
    %20 = vector.shape_cast %19 : vector<8xf32> to vector<8x1xf32>
    %21 = tpu.reciprocal %20 {approx = true} : vector<8x1xf32> -> vector<8x1xf32>
    %22 = vector.broadcast %21 : vector<8x1xf32> to vector<8x8xf32>
    %23 = arith.mulf %18, %22 : vector<8x8xf32>
    %24 = arith.truncf %23 : vector<8x8xf32> to vector<8x8xbf16>
    %c0_7 = arith.constant 0 : index
    %c0_8 = arith.constant 0 : index
    %c0_9 = arith.constant 0 : index
    %c0_10 = arith.constant 0 : index
    %25 = vector.load %arg16[%c0_7, %c0_8, %c0_9, %c0_10] : memref<1x2x8x8xbf16, #tpu.memory_space<vmem>>, vector<1x1x8x8xbf16>
    %26 = vector.shape_cast %25 : vector<1x1x8x8xbf16> to vector<8x8xbf16>
    %27 = vector.shape_cast %24 : vector<8x8xbf16> to vector<1x1x8x8xbf16>
    tpu.vector_store %arg16[%c0_7, %c0_8, %c0_9, %c0_10], %27 {strides = array<i32>} : memref<1x2x8x8xbf16, #tpu.memory_space<vmem>>, vector<1x1x8x8xbf16>,
    %cst_11 = arith.constant dense<0.000000e+00> : vector<8x16xf32>
    %28 = tpu.matmul %24, %12, %cst_11 {dimension_numbers = #tpu.dot_dimension_numbers<[1], [0], [0], [1], [0, 0, 1, 1], [], []>} : vector<8x8xbf16>, vector<8x16xbf16>, vector<8x16xf32> -> vector<8x16xf32>
    %29 = arith.truncf %28 : vector<8x16xf32> to vector<8x16xbf16>
    %c0_12 = arith.constant 0 : index
    %c0_13 = arith.constant 0 : index
    %30 = vector.load %arg18[%c0_12, %c0_13] : memref<8x32xbf16, #tpu.memory_space<vmem>>, vector<8x16xbf16>
    tpu.vector_store %arg18[%c0_12, %c0_13], %29 {strides = array<i32>} : memref<8x32xbf16, #tpu.memory_space<vmem>>, vector<8x16xbf16>,
    %31 = vector.extract_strided_slice %9 {offsets = [0, 16], sizes = [8, 16], strides = [1, 1]} : vector<8x96xbf16> to vector<8x16xbf16>
    %c0_14 = arith.constant 0 : index
    %c48 = arith.constant 48 : index
    %32 = vector.load %arg17[%c0_14, %c48] : memref<8x96xbf16, #tpu.memory_space<vmem>>, vector<8x16xbf16>
    %c0_15 = arith.constant 0 : index
    %c80 = arith.constant 80 : index
    %33 = vector.load %arg17[%c0_15, %c80] : memref<8x96xbf16, #tpu.memory_space<vmem>>, vector<8x16xbf16>
    "tpu.trace_start"() <{level = 10 : i32, message = "qd,kd->qk"}> : () -> ()
    %cst_16 = arith.constant dense<0.000000e+00> : vector<8x8xf32>
    %34 = tpu.matmul %31, %32, %cst_16 {dimension_numbers = #tpu.dot_dimension_numbers<[1], [1], [0], [0], [0, 0, 1, 0], [], []>} : vector<8x16xbf16>, vector<8x16xbf16>, vector<8x8xf32> -> vector<8x8xf32>
    "tpu.trace_stop"() : () -> ()
    %cst_17 = arith.constant dense<0xFF800000> : vector<8xf32>
    %35 = vector.multi_reduction <maximumf>, %34, %cst_17 [1] : vector<8x8xf32> to vector<8xf32>
    %36 = vector.shape_cast %35 : vector<8xf32> to vector<8x1xf32>
    %37 = vector.broadcast %36 : vector<8x1xf32> to vector<8x8xf32>
    %38 = arith.subf %34, %37 : vector<8x8xf32>
    %39 = math.exp %38 : vector<8x8xf32>
    %cst_18 = arith.constant dense<0.000000e+00> : vector<8xf32>
    %40 = vector.multi_reduction <add>, %39, %cst_18 [1] : vector<8x8xf32> to vector<8xf32>
    %41 = vector.shape_cast %40 : vector<8xf32> to vector<8x1xf32>
    %42 = tpu.reciprocal %41 {approx = true} : vector<8x1xf32> -> vector<8x1xf32>
    %43 = vector.broadcast %42 : vector<8x1xf32> to vector<8x8xf32>
    %44 = arith.mulf %39, %43 : vector<8x8xf32>
    %45 = arith.truncf %44 : vector<8x8xf32> to vector<8x8xbf16>
    %c0_19 = arith.constant 0 : index
    %c1 = arith.constant 1 : index
    %c0_20 = arith.constant 0 : index
    %c0_21 = arith.constant 0 : index
    %46 = vector.load %arg16[%c0_19, %c1, %c0_20, %c0_21] : memref<1x2x8x8xbf16, #tpu.memory_space<vmem>>, vector<1x1x8x8xbf16>
    %47 = vector.shape_cast %46 : vector<1x1x8x8xbf16> to vector<8x8xbf16>
    %48 = vector.shape_cast %45 : vector<8x8xbf16> to vector<1x1x8x8xbf16>
    tpu.vector_store %arg16[%c0_19, %c1, %c0_20, %c0_21], %48 {strides = array<i32>} : memref<1x2x8x8xbf16, #tpu.memory_space<vmem>>, vector<1x1x8x8xbf16>,
    %cst_22 = arith.constant dense<0.000000e+00> : vector<8x16xf32>
    %49 = tpu.matmul %45, %33, %cst_22 {dimension_numbers = #tpu.dot_dimension_numbers<[1], [0], [0], [1], [0, 0, 1, 1], [], []>} : vector<8x8xbf16>, vector<8x16xbf16>, vector<8x16xf32> -> vector<8x16xf32>
    %50 = arith.truncf %49 : vector<8x16xf32> to vector<8x16xbf16>
    %c0_23 = arith.constant 0 : index
    %c16 = arith.constant 16 : index
    %51 = vector.load %arg18[%c0_23, %c16] : memref<8x32xbf16, #tpu.memory_space<vmem>>, vector<8x16xbf16>
    tpu.vector_store %arg18[%c0_23, %c16], %50 {strides = array<i32>} : memref<8x32xbf16, #tpu.memory_space<vmem>>, vector<8x16xbf16>,
    %c0_24 = arith.constant 0 : index
    %c0_25 = arith.constant 0 : index
    %52 = vector.load %arg18[%c0_24, %c0_25] : memref<8x32xbf16, #tpu.memory_space<vmem>>, vector<8x32xbf16>
    %c0_26 = arith.constant 0 : index
    %c0_27 = arith.constant 0 : index
    %53 = vector.load %arg5[%c0_26, %c0_27] : memref<32x32xbf16, #tpu.memory_space<vmem>>, vector<32x32xbf16>
    %cst_28 = arith.constant dense<0.000000e+00> : vector<8x32xf32>
    %54 = tpu.matmul %52, %53, %cst_28 {dimension_numbers = #tpu.dot_dimension_numbers<[1], [0], [0], [1], [0, 0, 1, 1], [], []>} : vector<8x32xbf16>, vector<32x32xbf16>, vector<8x32xf32> -> vector<8x32xf32>
    %c0_29 = arith.constant 0 : index
    %c0_30 = arith.constant 0 : index
    %55 = vector.load %arg6[%c0_29, %c0_30] : memref<1x32xf32, #tpu.memory_space<vmem>>, vector<1x32xf32>
    %56 = vector.shape_cast %55 : vector<1x32xf32> to vector<32xf32>
    %57 = vector.shape_cast %56 : vector<32xf32> to vector<1x32xf32>
    %58 = vector.broadcast %57 : vector<1x32xf32> to vector<8x32xf32>
    %59 = arith.addf %54, %58 : vector<8x32xf32>
    %60 = arith.addf %59, %7 : vector<8x32xf32>
    %c0_31 = arith.constant 0 : index
    %c0_32 = arith.constant 0 : index
    %61 = vector.load %arg13[%c0_31, %c0_32] : memref<1x32xf32, #tpu.memory_space<vmem>>, vector<1x32xf32>
    %62 = vector.shape_cast %61 : vector<1x32xf32> to vector<32xf32>
    %c0_33 = arith.constant 0 : index
    %c0_34 = arith.constant 0 : index
    %63 = vector.load %arg14[%c0_33, %c0_34] : memref<1x32xf32, #tpu.memory_space<vmem>>, vector<1x32xf32>
    %64 = vector.shape_cast %63 : vector<1x32xf32> to vector<32xf32>
    %cst_35 = arith.constant dense<0.000000e+00> : vector<8xf32>
    %65 = vector.multi_reduction <add>, %60, %cst_35 [1] : vector<8x32xf32> to vector<8xf32>
    %66 = vector.shape_cast %65 : vector<8xf32> to vector<8x1xf32>
    %cst_36 = arith.constant 3.200000e+01 : f32
    %67 = vector.broadcast %cst_36 : f32 to vector<8x1xf32>
    %68 = arith.divf %66, %67 : vector<8x1xf32>
    %69 = vector.broadcast %68 : vector<8x1xf32> to vector<8x32xf32>
    %70 = arith.subf %60, %69 : vector<8x32xf32>
    %71 = arith.mulf %70, %70 : vector<8x32xf32>
    %cst_37 = arith.constant dense<0.000000e+00> : vector<8xf32>
    %72 = vector.multi_reduction <add>, %71, %cst_37 [1] : vector<8x32xf32> to vector<8xf32>
    %73 = vector.shape_cast %72 : vector<8xf32> to vector<8x1xf32>
    %cst_38 = arith.constant 3.200000e+01 : f32
    %74 = vector.broadcast %cst_38 : f32 to vector<8x1xf32>
    %75 = arith.divf %73, %74 : vector<8x1xf32>
    %76 = vector.broadcast %68 : vector<8x1xf32> to vector<8x32xf32>
    %77 = arith.subf %60, %76 : vector<8x32xf32>
    %cst_39 = arith.constant 9.99999974E-6 : f32
    %78 = vector.broadcast %cst_39 : f32 to vector<8x1xf32>
    %79 = arith.addf %75, %78 : vector<8x1xf32>
    %80 = math.rsqrt %79 : vector<8x1xf32>
    %81 = vector.broadcast %80 : vector<8x1xf32> to vector<8x32xf32>
    %82 = arith.mulf %77, %81 : vector<8x32xf32>
    %83 = vector.shape_cast %62 : vector<32xf32> to vector<1x32xf32>
    %84 = vector.broadcast %83 : vector<1x32xf32> to vector<8x32xf32>
    %85 = arith.mulf %82, %84 : vector<8x32xf32>
    %86 = vector.shape_cast %64 : vector<32xf32> to vector<1x32xf32>
    %87 = vector.broadcast %86 : vector<1x32xf32> to vector<8x32xf32>
    %88 = arith.addf %85, %87 : vector<8x32xf32>
    %89 = arith.truncf %88 : vector<8x32xf32> to vector<8x32xbf16>
    %c0_40 = arith.constant 0 : index
    %c0_41 = arith.constant 0 : index
    %90 = vector.load %arg9[%c0_40, %c0_41] : memref<32x64xbf16, #tpu.memory_space<vmem>>, vector<32x64xbf16>
    %cst_42 = arith.constant dense<0.000000e+00> : vector<8x64xf32>
    %91 = tpu.matmul %89, %90, %cst_42 {dimension_numbers = #tpu.dot_dimension_numbers<[1], [0], [0], [1], [0, 0, 1, 1], [], []>} : vector<8x32xbf16>, vector<32x64xbf16>, vector<8x64xf32> -> vector<8x64xf32>
    %c0_43 = arith.constant 0 : index
    %c0_44 = arith.constant 0 : index
    %92 = vector.load %arg10[%c0_43, %c0_44] : memref<1x64xf32, #tpu.memory_space<vmem>>, vector<1x64xf32>
    %93 = vector.shape_cast %92 : vector<1x64xf32> to vector<64xf32>
    %94 = vector.shape_cast %93 : vector<64xf32> to vector<1x64xf32>
    %95 = vector.broadcast %94 : vector<1x64xf32> to vector<8x64xf32>
    %96 = arith.addf %91, %95 : vector<8x64xf32>
    %cst_45 = arith.constant 0.000000e+00 : f32
    %97 = vector.broadcast %cst_45 : f32 to vector<8x64xf32>
    %98 = arith.maximumf %96, %97 : vector<8x64xf32>
    %99 = arith.truncf %98 : vector<8x64xf32> to vector<8x64xbf16>
    %c0_46 = arith.constant 0 : index
    %c0_47 = arith.constant 0 : index
    %100 = vector.load %arg11[%c0_46, %c0_47] : memref<64x32xbf16, #tpu.memory_space<vmem>>, vector<64x32xbf16>
    %cst_48 = arith.constant dense<0.000000e+00> : vector<8x32xf32>
    %101 = tpu.matmul %99, %100, %cst_48 {dimension_numbers = #tpu.dot_dimension_numbers<[1], [0], [0], [1], [0, 0, 1, 1], [], []>} : vector<8x64xbf16>, vector<64x32xbf16>, vector<8x32xf32> -> vector<8x32xf32>
    %c0_49 = arith.constant 0 : index
    %c0_50 = arith.constant 0 : index
    %102 = vector.load %arg12[%c0_49, %c0_50] : memref<1x32xf32, #tpu.memory_space<vmem>>, vector<1x32xf32>
    %103 = vector.shape_cast %102 : vector<1x32xf32> to vector<32xf32>
    %104 = vector.shape_cast %103 : vector<32xf32> to vector<1x32xf32>
    %105 = vector.broadcast %104 : vector<1x32xf32> to vector<8x32xf32>
    %106 = arith.addf %101, %105 : vector<8x32xf32>
    %107 = arith.addf %106, %60 : vector<8x32xf32>
    %c0_51 = arith.constant 0 : index
    %c0_52 = arith.constant 0 : index
    %c0_53 = arith.constant 0 : index
    %108 = vector.load %arg15[%c0_51, %c0_52, %c0_53] : memref<1x8x32xf32, #tpu.memory_space<vmem>>, vector<1x8x32xf32>
    %109 = vector.shape_cast %108 : vector<1x8x32xf32> to vector<8x32xf32>
    %110 = vector.shape_cast %107 : vector<8x32xf32> to vector<1x8x32xf32>
    tpu.vector_store %arg15[%c0_51, %c0_52, %c0_53], %110 {strides = array<i32>} : memref<1x8x32xf32, #tpu.memory_space<vmem>>, vector<1x8x32xf32>,
    return
  }
  func.func @transform_0(%arg0: i32, %arg1: i32) -> (i32, i32, i32) {
    %c0_i32 = arith.constant 0 : i32
    %c0_i32_0 = arith.constant 0 : i32
    %c0_i32_1 = arith.constant 0 : i32
    return %arg0, %c0_i32, %c0_i32_0 : i32, i32, i32
  }
  func.func @transform_1(%arg0: i32, %arg1: i32) -> (i32, i32) {
    %c0_i32 = arith.constant 0 : i32
    %c0_i32_0 = arith.constant 0 : i32
    %c0_i32_1 = arith.constant 0 : i32
    return %c0_i32, %c0_i32_0 : i32, i32
  }
  func.func @transform_2(%arg0: i32, %arg1: i32) -> (i32, i32) {
    %c0_i32 = arith.constant 0 : i32
    %c0_i32_0 = arith.constant 0 : i32
    %c0_i32_1 = arith.constant 0 : i32
    return %c0_i32, %c0_i32_0 : i32, i32
  }
  func.func @transform_3(%arg0: i32, %arg1: i32) -> (i32, i32) {
    %c0_i32 = arith.constant 0 : i32
    %c0_i32_0 = arith.constant 0 : i32
    %c0_i32_1 = arith.constant 0 : i32
    return %c0_i32, %c0_i32_0 : i32, i32
  }
  func.func @transform_4(%arg0: i32, %arg1: i32) -> (i32, i32) {
    %c0_i32 = arith.constant 0 : i32
    %c0_i32_0 = arith.constant 0 : i32
    %c0_i32_1 = arith.constant 0 : i32
    return %c0_i32, %c0_i32_0 : i32, i32
  }
  func.func @transform_5(%arg0: i32, %arg1: i32) -> (i32, i32) {
    %c0_i32 = arith.constant 0 : i32
    %c0_i32_0 = arith.constant 0 : i32
    %c0_i32_1 = arith.constant 0 : i32
    return %c0_i32, %c0_i32_0 : i32, i32
  }
  func.func @transform_6(%arg0: i32, %arg1: i32) -> (i32, i32) {
    %c0_i32 = arith.constant 0 : i32
    %c0_i32_0 = arith.constant 0 : i32
    %c0_i32_1 = arith.constant 0 : i32
    return %c0_i32, %c0_i32_0 : i32, i32
  }
  func.func @transform_7(%arg0: i32, %arg1: i32) -> (i32, i32) {
    %c0_i32 = arith.constant 0 : i32
    %c0_i32_0 = arith.constant 0 : i32
    %c0_i32_1 = arith.constant 0 : i32
    return %c0_i32, %c0_i32_0 : i32, i32
  }
  func.func @transform_8(%arg0: i32, %arg1: i32) -> (i32, i32) {
    %c0_i32 = arith.constant 0 : i32
    %c0_i32_0 = arith.constant 0 : i32
    %c0_i32_1 = arith.constant 0 : i32
    return %c0_i32, %c0_i32_0 : i32, i32
  }
  func.func @transform_9(%arg0: i32, %arg1: i32) -> (i32, i32) {
    %c0_i32 = arith.constant 0 : i32
    %c0_i32_0 = arith.constant 0 : i32
    %c0_i32_1 = arith.constant 0 : i32
    return %c0_i32, %c0_i32_0 : i32, i32
  }
  func.func @transform_10(%arg0: i32, %arg1: i32) -> (i32, i32) {
    %c0_i32 = arith.constant 0 : i32
    %c0_i32_0 = arith.constant 0 : i32
    %c0_i32_1 = arith.constant 0 : i32
    return %c0_i32, %c0_i32_0 : i32, i32
  }
  func.func @transform_11(%arg0: i32, %arg1: i32) -> (i32, i32) {
    %c0_i32 = arith.constant 0 : i32
    %c0_i32_0 = arith.constant 0 : i32
    %c0_i32_1 = arith.constant 0 : i32
    return %c0_i32, %c0_i32_0 : i32, i32
  }
  func.func @transform_12(%arg0: i32, %arg1: i32) -> (i32, i32) {
    %c0_i32 = arith.constant 0 : i32
    %c0_i32_0 = arith.constant 0 : i32
    %c0_i32_1 = arith.constant 0 : i32
    return %c0_i32, %c0_i32_0 : i32, i32
  }
  func.func @transform_13(%arg0: i32, %arg1: i32) -> (i32, i32, i32) {
    %c0_i32 = arith.constant 0 : i32
    %c0_i32_0 = arith.constant 0 : i32
    return %arg0, %arg1, %c0_i32 : i32, i32, i32
  }
  func.func @transform_14(%arg0: i32, %arg1: i32) -> (i32, i32, i32, i32) {
    %c0_i32 = arith.constant 0 : i32
    %c0_i32_0 = arith.constant 0 : i32
    %c0_i32_1 = arith.constant 0 : i32
    return %arg0, %c0_i32, %arg1, %c0_i32_0 : i32, i32, i32, i32
  }
}

</mosaic_0001>

<llo_original>
// kernel: tpu_custom_call.1
$region0: #{tpu_custom_call.1}
  #allocation0 [shape = 'u32[]', space=smem, size = 0x4, offset = 0x4, fixed_abs, tag = 'smem constant byte address 0x4 - core index']
  #allocation1 [shape = 'u32[144,128]{1,0:T(1,128)}', space=vmem, size = 0x12000, scoped, tag = 'internal scratch']
  #allocation2 [shape = 'bf16[8,96]{1,0:T(8,128)(2,1)}', space=vmem, size = 0x800, scoped, tag = 'scratch operand']
  #allocation3 [shape = 'bf16[8,32]{1,0:T(8,128)(2,1)}', space=vmem, size = 0x800, scoped, tag = 'scratch operand']
  %s0 = inlined_call_operand.vmem [shape: f32[2,8,32], index: 0, kind: input, shape index: {}]
  %s1 = inlined_call_operand.vmem [shape: bf16[32,96], index: 1, kind: input, shape index: {}]
  %s2 = inlined_call_operand.hbm [shape: f32[1,96], index: 2, kind: input, shape index: {}]
  %s3 = inlined_call_operand.vmem [shape: bf16[32,32], index: 3, kind: input, shape index: {}]
  %s4 = inlined_call_operand.hbm [shape: f32[1,32], index: 4, kind: input, shape index: {}]
  %s5 = inlined_call_operand.hbm [shape: f32[1,32], index: 5, kind: input, shape index: {}]
  %s6 = inlined_call_operand.hbm [shape: f32[1,32], index: 6, kind: input, shape index: {}]
  %s7 = inlined_call_operand.hbm [shape: bf16[32,64], index: 7, kind: input, shape index: {}]
  %s8 = inlined_call_operand.hbm [shape: f32[1,64], index: 8, kind: input, shape index: {}]
  %s9 = inlined_call_operand.vmem [shape: bf16[64,32], index: 9, kind: input, shape index: {}]
  %s10 = inlined_call_operand.vmem [shape: f32[1,32], index: 10, kind: input, shape index: {}]
  %s11 = inlined_call_operand.vmem [shape: f32[1,32], index: 11, kind: input, shape index: {}]
  %s12 = inlined_call_operand.vmem [shape: f32[1,32], index: 12, kind: input, shape index: {}]
  %s13 = inlined_call_operand.hbm [shape: f32[2,8,32], index: 13, kind: output, shape index: {0}]
  %s14 = inlined_call_operand.hbm [shape: bf16[2,2,8,8], index: 14, kind: output, shape index: {1}]
  %15 = xla_tuple %s13, %s14
  %s16 = sld [smem:[#allocation0]]
  $region121: #{tpu_custom_call.1} parent=0
    _
  %s18 = ssub.s32 1, %s16
  %s19 = scalar_select 0, %s18, %s16
  $region1: #{tpu_custom_call.1} parent=0
    #allocation4 [shape = 'u8[512]{0}', space=vmem, size = 0x400, scoped, tag = 'input window, operand 2, single buffered']
    #allocation5 [shape = 's32[2]{0}', space=sflag, size = 0x8, scoped, tag = 'scoped memory for tpu_custom_call.1']
    #allocation6 [shape = 's32[2]{0}', space=sflag, size = 0x8, scoped, tag = 'scoped memory for tpu_custom_call.1']
    #allocation7 [shape = 'u8[512]{0}', space=vmem, size = 0x400, scoped, tag = 'input window, operand 4, single buffered']
    #allocation8 [shape = 's32[1]{0}', space=sflag, size = 0x4, scoped, tag = 'scoped memory for tpu_custom_call.1']
    #allocation9 [shape = 'u8[512]{0}', space=vmem, size = 0x400, scoped, tag = 'input window, operand 5, single buffered']
    #allocation10 [shape = 'u8[512]{0}', space=vmem, size = 0x400, scoped, tag = 'input window, operand 6, single buffered']
    #allocation11 [shape = 's32[1]{0}', space=sflag, size = 0x4, scoped, tag = 'scoped memory for tpu_custom_call.1']
    #allocation12 [shape = 'u8[8192]{0}', space=vmem, size = 0x2000, scoped, tag = 'input window, operand 7, single buffered']
    #allocation13 [shape = 'u8[512]{0}', space=vmem, size = 0x400, scoped, tag = 'input window, operand 8, single buffered']
    #allocation14 [shape = 's32[1]{0}', space=sflag, size = 0x4, scoped, tag = 'scoped memory for tpu_custom_call.1']
    #allocation15 [shape = 'u8[8192]{0}', space=vmem, size = 0x2000, scoped, tag = 'output window, operand 0']
    #allocation16 [shape = 'u8[8192]{0}', space=vmem, size = 0x2000, scoped, tag = 'output window, operand 1']
    #allocation17 [shape = 's32[2]{0}', space=sflag, size = 0x8, scoped, tag = 'scoped memory for tpu_custom_call.1']
    %20 = vsyncpa [#allocation5], 0
    %21 = vsyncpa [#allocation8], 0
    %22 = vsyncpa [#allocation11], 0
    %23 = vsyncpa [#allocation14], 0
    %24 = vsyncpa [#allocation6], 0
    %s25 = scalar_lea.sflag [#allocation6], 1
    %26 = vsyncpa %s25, 0
    %27 = vsyncpa [#allocation17], 0
    %s28 = scalar_lea.sflag [#allocation17], 1
    %29 = vsyncpa %s28, 0
    loop: start=0, step=1, limit=4
    $region2: #{tpu_custom_call.1} parent=1 // loop_pre_header
      _
    $region3: #{tpu_custom_call.1} parent=1 // loop_header
      %s31 = sphi 0, %s35
      %p32 = scmp.ge.s32.totalorder %s31, 4
      %s38 = sphi 0, %s50
      %s39 = sphi 0, %s46
      %s40 = sphi 0, %s38
      %s41 = sphi 0, %s39
      %s42 = sphi 0, %s40
      %s43 = sphi 0, %s41
      %s53 = sphi 0, %s55
      %s56 = sphi 0, %s53
      %s57 = sphi 0, %s56
      %s73 = sphi 0, %s57
      %s77 = sphi 0, %s77
      %s79 = sphi 0, %s77
      %s80 = sphi 0, %s79
      %s94 = sphi 0, %s80
      %s98 = sphi 0, %s98
      %s100 = sphi 0, %s98
      %s101 = sphi 0, %s100
      %s115 = sphi 0, %s101
      %s119 = sphi 0, %s119
      %s121 = sphi 0, %s119
      %s122 = sphi 0, %s121
      %s136 = sphi 0, %s122
      %s140 = sphi 0, %s140
      %s142 = sphi 0, %s140
      %s143 = sphi 0, %s142
      %s157 = sphi 0, %s143
      %s161 = sphi 0, %s161
      %s163 = sphi 0, %s161
      %s164 = sphi 0, %s163
      %s178 = sphi 0, %s164
      %s182 = sphi 0, %s182
      %s184 = sphi 0, %s182
      %s185 = sphi 0, %s184
      %s199 = sphi 0, %s185
      %s203 = sphi 0, %s203
      %s205 = sphi 0, %s203
      %s206 = sphi 0, %s205
      %s220 = sphi 0, %s206
      %s224 = sphi 0, %s224
      %s226 = sphi 0, %s224
      %s227 = sphi 0, %s226
      %s241 = sphi 0, %s227
      %s245 = sphi 0, %s245
      %s247 = sphi 0, %s245
      %s248 = sphi 0, %s247
      %s262 = sphi 0, %s248
      %s266 = sphi 0, %s266
      %s268 = sphi 0, %s266
      %s269 = sphi 0, %s268
      %s283 = sphi 0, %s269
      %s287 = sphi 0, %s287
      %s289 = sphi 0, %s287
      %s290 = sphi 0, %s289
      %s304 = sphi 0, %s290
      %s308 = sphi 0, %s308
      %s310 = sphi 0, %s308
      %s311 = sphi 0, %s310
      %s325 = sphi 0, %s311
      %s333 = sphi 0, %s335
      %s336 = sphi 0, %s333
      %s337 = sphi 0, %s336
      %s353 = sphi 0, %s337
      %s361 = sphi 0, %s363
      %s364 = sphi 0, %s361
      %s365 = sphi 0, %s364
      %s381 = sphi 0, %s365
    $region4: #{tpu_custom_call.1} parent=1 // loop_header_branch
      %34 = sbr.rel (%p32) target = $region8
    $region5: #{tpu_custom_call.1} parent=1 // loop_body
      %s36 = ssub.s32 %s31, 1
      %s37 = ssub.s32 %s31, 2
      %s44 = sadd.s32 1, %s39
      %p45 = scmp.ge.s32.totalorder %s44, 1
      %s46 = scalar_select %p45, 0, %s44
      %s47 = sadd.s32 1, %s38
      %s48 = scalar_select %p45, %s47, %s38
      %p49 = scmp.ge.s32.totalorder %s48, 2
      %s50 = scalar_select %p49, 0, %s48
      %s51 = ssub.s32 %s38, %s50
      %p52 = scmp.eq.s32.totalorder %s51, 0
      %s54 = sadd.s32 %s53, 1
      %s55 = scalar_select %p52, %s53, %s54
      %p58 = pneg %p52
      %p59 = scmp.eq.s32.totalorder %s31, 1
      %p60 = por %p58, %p59
      %p61 = scmp.ne.s32.totalorder %s53, %s56
      %p62 = scmp.eq.s32.totalorder %s31, 0
      %p63 = por %p61, %p62
      %p64 = scmp.ne.s32.totalorder %s53, %s56
      %p65 = scmp.eq.s32.totalorder %s36, 1
      %p66 = por %p64, %p65
      %p67 = scmp.ne.s32.totalorder %s56, %s57
      %p68 = scmp.eq.s32.totalorder %s36, 0
      %p69 = por %p67, %p68
      %p70 = scmp.ne.s32.totalorder %s56, %s57
      %p71 = scmp.eq.s32.totalorder %s37, 1
      %p72 = por %p70, %p71
      %p74 = scmp.ne.s32.totalorder %s57, %s73
      %p75 = scmp.eq.s32.totalorder %s37, 0
      %p76 = por %p74, %p75
      %s78 = sadd.s32 %s77, 1
      %p81 = scmp.eq.s32.totalorder %s31, 1
      %p82 = scmp.ne.s32.totalorder %s77, %s79
      %p83 = scmp.eq.s32.totalorder %s31, 0
      %p84 = por %p82, %p83
      %p85 = scmp.ne.s32.totalorder %s77, %s79
      %p86 = scmp.eq.s32.totalorder %s36, 1
      %p87 = por %p85, %p86
      %p88 = scmp.ne.s32.totalorder %s79, %s80
      %p89 = scmp.eq.s32.totalorder %s36, 0
      %p90 = por %p88, %p89
      %p91 = scmp.ne.s32.totalorder %s79, %s80
      %p92 = scmp.eq.s32.totalorder %s37, 1
      %p93 = por %p91, %p92
      %p95 = scmp.ne.s32.totalorder %s80, %s94
      %p96 = scmp.eq.s32.totalorder %s37, 0
      %p97 = por %p95, %p96
      %s99 = sadd.s32 %s98, 1
      %p102 = scmp.eq.s32.totalorder %s31, 1
      %p103 = scmp.ne.s32.totalorder %s98, %s100
      %p104 = scmp.eq.s32.totalorder %s31, 0
      %p105 = por %p103, %p104
      %p106 = scmp.ne.s32.totalorder %s98, %s100
      %p107 = scmp.eq.s32.totalorder %s36, 1
      %p108 = por %p106, %p107
      %p109 = scmp.ne.s32.totalorder %s100, %s101
      %p110 = scmp.eq.s32.totalorder %s36, 0
      %p111 = por %p109, %p110
      %p112 = scmp.ne.s32.totalorder %s100, %s101
      %p113 = scmp.eq.s32.totalorder %s37, 1
      %p114 = por %p112, %p113
      %p116 = scmp.ne.s32.totalorder %s101, %s115
      %p117 = scmp.eq.s32.totalorder %s37, 0
      %p118 = por %p116, %p117
      %s120 = sadd.s32 %s119, 1
      %p123 = scmp.eq.s32.totalorder %s31, 1
      %p124 = scmp.ne.s32.totalorder %s119, %s121
      %p125 = scmp.eq.s32.totalorder %s31, 0
      %p126 = por %p124, %p125
      %p127 = scmp.ne.s32.totalorder %s119, %s121
      %p128 = scmp.eq.s32.totalorder %s36, 1
      %p129 = por %p127, %p128
      %p130 = scmp.ne.s32.totalorder %s121, %s122
      %p131 = scmp.eq.s32.totalorder %s36, 0
      %p132 = por %p130, %p131
      %p133 = scmp.ne.s32.totalorder %s121, %s122
      %p134 = scmp.eq.s32.totalorder %s37, 1
      %p135 = por %p133, %p134
      %p137 = scmp.ne.s32.totalorder %s122, %s136
      %p138 = scmp.eq.s32.totalorder %s37, 0
      %p139 = por %p137, %p138
      %s141 = sadd.s32 %s140, 1
      %p144 = scmp.eq.s32.totalorder %s31, 1
      %p145 = scmp.ne.s32.totalorder %s140, %s142
      %p146 = scmp.eq.s32.totalorder %s31, 0
      %p147 = por %p145, %p146
      %p148 = scmp.ne.s32.totalorder %s140, %s142
      %p149 = scmp.eq.s32.totalorder %s36, 1
      %p150 = por %p148, %p149
      %p151 = scmp.ne.s32.totalorder %s142, %s143
      %p152 = scmp.eq.s32.totalorder %s36, 0
      %p153 = por %p151, %p152
      %p154 = scmp.ne.s32.totalorder %s142, %s143
      %p155 = scmp.eq.s32.totalorder %s37, 1
      %p156 = por %p154, %p155
      %p158 = scmp.ne.s32.totalorder %s143, %s157
      %p159 = scmp.eq.s32.totalorder %s37, 0
      %p160 = por %p158, %p159
      %s162 = sadd.s32 %s161, 1
      %p165 = scmp.eq.s32.totalorder %s31, 1
      %p166 = scmp.ne.s32.totalorder %s161, %s163
      %p167 = scmp.eq.s32.totalorder %s31, 0
      %p168 = por %p166, %p167
      %p169 = scmp.ne.s32.totalorder %s161, %s163
      %p170 = scmp.eq.s32.totalorder %s36, 1
      %p171 = por %p169, %p170
      %p172 = scmp.ne.s32.totalorder %s163, %s164
      %p173 = scmp.eq.s32.totalorder %s36, 0
      %p174 = por %p172, %p173
      %p175 = scmp.ne.s32.totalorder %s163, %s164
      %p176 = scmp.eq.s32.totalorder %s37, 1
      %p177 = por %p175, %p176
      %p179 = scmp.ne.s32.totalorder %s164, %s178
      %p180 = scmp.eq.s32.totalorder %s37, 0
      %p181 = por %p179, %p180
      %s183 = sadd.s32 %s182, 1
      %p186 = scmp.eq.s32.totalorder %s31, 1
      %p187 = scmp.ne.s32.totalorder %s182, %s184
      %p188 = scmp.eq.s32.totalorder %s31, 0
      %p189 = por %p187, %p188
      %p190 = scmp.ne.s32.totalorder %s182, %s184
      %p191 = scmp.eq.s32.totalorder %s36, 1
      %p192 = por %p190, %p191
      %p193 = scmp.ne.s32.totalorder %s184, %s185
      %p194 = scmp.eq.s32.totalorder %s36, 0
      %p195 = por %p193, %p194
      %p196 = scmp.ne.s32.totalorder %s184, %s185
      %p197 = scmp.eq.s32.totalorder %s37, 1
      %p198 = por %p196, %p197
      %p200 = scmp.ne.s32.totalorder %s185, %s199
      %p201 = scmp.eq.s32.totalorder %s37, 0
      %p202 = por %p200, %p201
      %s204 = sadd.s32 %s203, 1
      %p207 = scmp.eq.s32.totalorder %s31, 1
      %p208 = scmp.ne.s32.totalorder %s203, %s205
      %p209 = scmp.eq.s32.totalorder %s31, 0
      %p210 = por %p208, %p209
      %p211 = scmp.ne.s32.totalorder %s203, %s205
      %p212 = scmp.eq.s32.totalorder %s36, 1
      %p213 = por %p211, %p212
      %p214 = scmp.ne.s32.totalorder %s205, %s206
      %p215 = scmp.eq.s32.totalorder %s36, 0
      %p216 = por %p214, %p215
      %p217 = scmp.ne.s32.totalorder %s205, %s206
      %p218 = scmp.eq.s32.totalorder %s37, 1
      %p219 = por %p217, %p218
      %p221 = scmp.ne.s32.totalorder %s206, %s220
      %p222 = scmp.eq.s32.totalorder %s37, 0
      %p223 = por %p221, %p222
      %s225 = sadd.s32 %s224, 1
      %p228 = scmp.eq.s32.totalorder %s31, 1
      %p229 = scmp.ne.s32.totalorder %s224, %s226
      %p230 = scmp.eq.s32.totalorder %s31, 0
      %p231 = por %p229, %p230
      %p232 = scmp.ne.s32.totalorder %s224, %s226
      %p233 = scmp.eq.s32.totalorder %s36, 1
      %p234 = por %p232, %p233
      %p235 = scmp.ne.s32.totalorder %s226, %s227
      %p236 = scmp.eq.s32.totalorder %s36, 0
      %p237 = por %p235, %p236
      %p238 = scmp.ne.s32.totalorder %s226, %s227
      %p239 = scmp.eq.s32.totalorder %s37, 1
      %p240 = por %p238, %p239
      %p242 = scmp.ne.s32.totalorder %s227, %s241
      %p243 = scmp.eq.s32.totalorder %s37, 0
      %p244 = por %p242, %p243
      %s246 = sadd.s32 %s245, 1
      %p249 = scmp.eq.s32.totalorder %s31, 1
      %p250 = scmp.ne.s32.totalorder %s245, %s247
      %p251 = scmp.eq.s32.totalorder %s31, 0
      %p252 = por %p250, %p251
      %p253 = scmp.ne.s32.totalorder %s245, %s247
      %p254 = scmp.eq.s32.totalorder %s36, 1
      %p255 = por %p253, %p254
      %p256 = scmp.ne.s32.totalorder %s247, %s248
      %p257 = scmp.eq.s32.totalorder %s36, 0
      %p258 = por %p256, %p257
      %p259 = scmp.ne.s32.totalorder %s247, %s248
      %p260 = scmp.eq.s32.totalorder %s37, 1
      %p261 = por %p259, %p260
      %p263 = scmp.ne.s32.totalorder %s248, %s262
      %p264 = scmp.eq.s32.totalorder %s37, 0
      %p265 = por %p263, %p264
      %s267 = sadd.s32 %s266, 1
      %p270 = scmp.eq.s32.totalorder %s31, 1
      %p271 = scmp.ne.s32.totalorder %s266, %s268
      %p272 = scmp.eq.s32.totalorder %s31, 0
      %p273 = por %p271, %p272
      %p274 = scmp.ne.s32.totalorder %s266, %s268
      %p275 = scmp.eq.s32.totalorder %s36, 1
      %p276 = por %p274, %p275
      %p277 = scmp.ne.s32.totalorder %s268, %s269
      %p278 = scmp.eq.s32.totalorder %s36, 0
      %p279 = por %p277, %p278
      %p280 = scmp.ne.s32.totalorder %s268, %s269
      %p281 = scmp.eq.s32.totalorder %s37, 1
      %p282 = por %p280, %p281
      %p284 = scmp.ne.s32.totalorder %s269, %s283
      %p285 = scmp.eq.s32.totalorder %s37, 0
      %p286 = por %p284, %p285
      %s288 = sadd.s32 %s287, 1
      %p291 = scmp.eq.s32.totalorder %s31, 1
      %p292 = scmp.ne.s32.totalorder %s287, %s289
      %p293 = scmp.eq.s32.totalorder %s31, 0
      %p294 = por %p292, %p293
      %p295 = scmp.ne.s32.totalorder %s287, %s289
      %p296 = scmp.eq.s32.totalorder %s36, 1
      %p297 = por %p295, %p296
      %p298 = scmp.ne.s32.totalorder %s289, %s290
      %p299 = scmp.eq.s32.totalorder %s36, 0
      %p300 = por %p298, %p299
      %p301 = scmp.ne.s32.totalorder %s289, %s290
      %p302 = scmp.eq.s32.totalorder %s37, 1
      %p303 = por %p301, %p302
      %p305 = scmp.ne.s32.totalorder %s290, %s304
      %p306 = scmp.eq.s32.totalorder %s37, 0
      %p307 = por %p305, %p306
      %s309 = sadd.s32 %s308, 1
      %p312 = scmp.eq.s32.totalorder %s31, 1
      %p313 = scmp.ne.s32.totalorder %s308, %s310
      %p314 = scmp.eq.s32.totalorder %s31, 0
      %p315 = por %p313, %p314
      %p316 = scmp.ne.s32.totalorder %s308, %s310
      %p317 = scmp.eq.s32.totalorder %s36, 1
      %p318 = por %p316, %p317
      %p319 = scmp.ne.s32.totalorder %s310, %s311
      %p320 = scmp.eq.s32.totalorder %s36, 0
      %p321 = por %p319, %p320
      %p322 = scmp.ne.s32.totalorder %s310, %s311
      %p323 = scmp.eq.s32.totalorder %s37, 1
      %p324 = por %p322, %p323
      %p326 = scmp.ne.s32.totalorder %s311, %s325
      %p327 = scmp.eq.s32.totalorder %s37, 0
      %p328 = por %p326, %p327
      %s329 = ssub.s32 %s38, %s50
      %s330 = ssub.s32 %s39, %s46
      %s331 = sor.u32 %s329, %s330
      %p332 = scmp.eq.s32.totalorder %s331, 0
      %s334 = sadd.s32 %s333, 1
      %s335 = scalar_select %p332, %s333, %s334
      %p338 = pneg %p332
      %p339 = scmp.eq.s32.totalorder %s31, 1
      %p340 = por %p338, %p339
      %p341 = scmp.ne.s32.totalorder %s333, %s336
      %p342 = scmp.eq.s32.totalorder %s31, 0
      %p343 = por %p341, %p342
      %p344 = scmp.ne.s32.totalorder %s333, %s336
      %p345 = scmp.eq.s32.totalorder %s36, 1
      %p346 = por %p344, %p345
      %p347 = scmp.ne.s32.totalorder %s336, %s337
      %p348 = scmp.eq.s32.totalorder %s36, 0
      %p349 = por %p347, %p348
      %p350 = scmp.ne.s32.totalorder %s336, %s337
      %p351 = scmp.eq.s32.totalorder %s37, 1
      %p352 = por %p350, %p351
      %p354 = scmp.ne.s32.totalorder %s337, %s353
      %p355 = scmp.eq.s32.totalorder %s37, 0
      %p356 = por %p354, %p355
      %s357 = ssub.s32 %s38, %s50
      %s358 = ssub.s32 %s39, %s46
      %s359 = sor.u32 %s357, %s358
      %p360 = scmp.eq.s32.totalorder %s359, 0
      %s362 = sadd.s32 %s361, 1
      %s363 = scalar_select %p360, %s361, %s362
      %p366 = pneg %p360
      %p367 = scmp.eq.s32.totalorder %s31, 1
      %p368 = por %p366, %p367
      %p369 = scmp.ne.s32.totalorder %s361, %s364
      %p370 = scmp.eq.s32.totalorder %s31, 0
      %p371 = por %p369, %p370
      %p372 = scmp.ne.s32.totalorder %s361, %s364
      %p373 = scmp.eq.s32.totalorder %s36, 1
      %p374 = por %p372, %p373
      %p375 = scmp.ne.s32.totalorder %s364, %s365
      %p376 = scmp.eq.s32.totalorder %s36, 0
      %p377 = por %p375, %p376
      %p378 = scmp.ne.s32.totalorder %s364, %s365
      %p379 = scmp.eq.s32.totalorder %s37, 1
      %p380 = por %p378, %p379
      %p382 = scmp.ne.s32.totalorder %s365, %s381
      %p383 = scmp.eq.s32.totalorder %s37, 0
      %p384 = por %p382, %p383
      %p385 = scmp.le.s32.totalorder 1, %s31
      %p386 = scmp.lt.s32.totalorder %s31, 3
      %p387 = pnand %p385, %p386
      %p388 = pneg %p387
      // Predicated region
      $region9: #{tpu_custom_call.1} parent=5 // pred_check
        _
      $region10: #{tpu_custom_call.1} parent=5 // pred_check_branch
        %390 = sbr.rel (%p387) target = $region12
      $region11: #{tpu_custom_call.1} parent=5 // pred_region
        %s391 = ssub.s32 %s31, 1
        // Predicated region
        $region13: #{tpu_custom_call.1} parent=11 // pred_check
          %p392 = pneg %p90
        $region14: #{tpu_custom_call.1} parent=11 // pred_check_branch
          %394 = sbr.rel (%p392) target = $region16
        $region15: #{tpu_custom_call.1} parent=11 // pred_region
          _
        $region16: #{tpu_custom_call.1} parent=11 // pred_fallthru
          _
        // Predicated region
        $region17: #{tpu_custom_call.1} parent=11 // pred_check
          %p395 = pneg %p111
        $region18: #{tpu_custom_call.1} parent=11 // pred_check_branch
          %397 = sbr.rel (%p395) target = $region20
        $region19: #{tpu_custom_call.1} parent=11 // pred_region
          %s399 = ssub.s32 16, 16
          %400 = vsyncadd [#allocation5], %s399
          %s402 = sshll.u32 [#allocation4], 4
          %s403 = int_to_ptr.vmem [resolvable:$true] %s402
          %405 = dma.hbm_to_vmem [thread:$0]  %s2, 16, %s403, [#allocation5]
        $region20: #{tpu_custom_call.1} parent=11 // pred_fallthru
          _
        // Predicated region
        $region21: #{tpu_custom_call.1} parent=11 // pred_check
          %p406 = pneg %p132
        $region22: #{tpu_custom_call.1} parent=11 // pred_check_branch
          %408 = sbr.rel (%p406) target = $region24
        $region23: #{tpu_custom_call.1} parent=11 // pred_region
          _
        $region24: #{tpu_custom_call.1} parent=11 // pred_fallthru
          _
        // Predicated region
        $region25: #{tpu_custom_call.1} parent=11 // pred_check
          %p409 = pneg %p153
        $region26: #{tpu_custom_call.1} parent=11 // pred_check_branch
          %411 = sbr.rel (%p409) target = $region28
        $region27: #{tpu_custom_call.1} parent=11 // pred_region
          %s413 = ssub.s32 16, 16
          %414 = vsyncadd [#allocation8], %s413
          %s416 = sshll.u32 [#allocation7], 4
          %s417 = int_to_ptr.vmem [resolvable:$true] %s416
          %419 = dma.hbm_to_vmem [thread:$0]  %s4, 16, %s417, [#allocation8]
        $region28: #{tpu_custom_call.1} parent=11 // pred_fallthru
          _
        // Predicated region
        $region29: #{tpu_custom_call.1} parent=11 // pred_check
          %p420 = pneg %p174
        $region30: #{tpu_custom_call.1} parent=11 // pred_check_branch
          %422 = sbr.rel (%p420) target = $region32
        $region31: #{tpu_custom_call.1} parent=11 // pred_region
          %s424 = ssub.s32 16, 16
          %425 = vsyncadd [#allocation8], %s424
          %s427 = sshll.u32 [#allocation9], 4
          %s428 = int_to_ptr.vmem [resolvable:$true] %s427
          %430 = dma.hbm_to_vmem [thread:$0]  %s5, 16, %s428, [#allocation8]
        $region32: #{tpu_custom_call.1} parent=11 // pred_fallthru
          _
        // Predicated region
        $region33: #{tpu_custom_call.1} parent=11 // pred_check
          %p431 = pneg %p195
        $region34: #{tpu_custom_call.1} parent=11 // pred_check_branch
          %433 = sbr.rel (%p431) target = $region36
        $region35: #{tpu_custom_call.1} parent=11 // pred_region
          %s435 = ssub.s32 16, 16
          %436 = vsyncadd [#allocation11], %s435
          %s438 = sshll.u32 [#allocation10], 4
          %s439 = int_to_ptr.vmem [resolvable:$true] %s438
          %441 = dma.hbm_to_vmem [thread:$0]  %s6, 16, %s439, [#allocation11]
        $region36: #{tpu_custom_call.1} parent=11 // pred_fallthru
          _
        // Predicated region
        $region37: #{tpu_custom_call.1} parent=11 // pred_check
          %p442 = pneg %p216
        $region38: #{tpu_custom_call.1} parent=11 // pred_check_branch
          %444 = sbr.rel (%p442) target = $region40
        $region39: #{tpu_custom_call.1} parent=11 // pred_region
          %s446 = ssub.s32 256, 256
          %447 = vsyncadd [#allocation11], %s446
          %s448 = sshll.u32 [#allocation12], 4
          %s449 = int_to_ptr.vmem [resolvable:$true] %s448
          %454 = dma.hbm_to_vmem [thread:$0]  %s7, 256, %s449, [#allocation11], 64, 64, 4
        $region40: #{tpu_custom_call.1} parent=11 // pred_fallthru
          _
        // Predicated region
        $region41: #{tpu_custom_call.1} parent=11 // pred_check
          %p455 = pneg %p237
        $region42: #{tpu_custom_call.1} parent=11 // pred_check_branch
          %457 = sbr.rel (%p455) target = $region44
        $region43: #{tpu_custom_call.1} parent=11 // pred_region
          %s459 = ssub.s32 16, 16
          %460 = vsyncadd [#allocation14], %s459
          %s462 = sshll.u32 [#allocation13], 4
          %s463 = int_to_ptr.vmem [resolvable:$true] %s462
          %465 = dma.hbm_to_vmem [thread:$0]  %s8, 16, %s463, [#allocation14]
        $region44: #{tpu_custom_call.1} parent=11 // pred_fallthru
          _
        // Predicated region
        $region45: #{tpu_custom_call.1} parent=11 // pred_check
          %p466 = pneg %p258
        $region46: #{tpu_custom_call.1} parent=11 // pred_check_branch
          %468 = sbr.rel (%p466) target = $region48
        $region47: #{tpu_custom_call.1} parent=11 // pred_region
          _
        $region48: #{tpu_custom_call.1} parent=11 // pred_fallthru
          _
        // Predicated region
        $region49: #{tpu_custom_call.1} parent=11 // pred_check
          %p469 = pneg %p279
        $region50: #{tpu_custom_call.1} parent=11 // pred_check_branch
          %471 = sbr.rel (%p469) target = $region52
        $region51: #{tpu_custom_call.1} parent=11 // pred_region
          _
        $region52: #{tpu_custom_call.1} parent=11 // pred_fallthru
          _
        // Predicated region
        $region53: #{tpu_custom_call.1} parent=11 // pred_check
          %p472 = pneg %p300
        $region54: #{tpu_custom_call.1} parent=11 // pred_check_branch
          %474 = sbr.rel (%p472) target = $region56
        $region55: #{tpu_custom_call.1} parent=11 // pred_region
          _
        $region56: #{tpu_custom_call.1} parent=11 // pred_fallthru
          _
        // Predicated region
        $region57: #{tpu_custom_call.1} parent=11 // pred_check
          %p475 = pneg %p321
        $region58: #{tpu_custom_call.1} parent=11 // pred_check_branch
          %477 = sbr.rel (%p475) target = $region60
        $region59: #{tpu_custom_call.1} parent=11 // pred_region
          _
        $region60: #{tpu_custom_call.1} parent=11 // pred_fallthru
          _
      $region12: #{tpu_custom_call.1} parent=5 // pred_fallthru
        _
      %p478 = scmp.lt.s32.totalorder %s31, 2
      // Predicated region
      $region61: #{tpu_custom_call.1} parent=5 // pred_check
        %p479 = pneg %p478
      $region62: #{tpu_custom_call.1} parent=5 // pred_check_branch
        %481 = sbr.rel (%p479) target = $region64
      $region63: #{tpu_custom_call.1} parent=5 // pred_region
        // Predicated region
        $region65: #{tpu_custom_call.1} parent=63 // pred_check
          %p482 = pneg %p63
        $region66: #{tpu_custom_call.1} parent=63 // pred_check_branch
          %484 = sbr.rel (%p482) target = $region68
        $region67: #{tpu_custom_call.1} parent=63 // pred_region
          %p485 = scmp.lt.s32.totalorder %s38, 1
          %s486 = scalar_select %p485, %s38, 1
          %s487 = smul.addr %s486, 8
          %s488 = scalar_lea.vmem %s0, %s487
        $region68: #{tpu_custom_call.1} parent=63 // pred_fallthru
          _
      $region64: #{tpu_custom_call.1} parent=5 // pred_fallthru
        _
      %p489 = scmp.le.s32.totalorder 1, %s31
      %p490 = scmp.lt.s32.totalorder %s31, 3
      %p491 = pnand %p489, %p490
      %p492 = pneg %p491
      // Predicated region
      $region69: #{tpu_custom_call.1} parent=5 // pred_check
        _
      $region70: #{tpu_custom_call.1} parent=5 // pred_check_branch
        %494 = sbr.rel (%p491) target = $region72
      $region71: #{tpu_custom_call.1} parent=5 // pred_region
        %s495 = ssub.s32 %s31, 1
        // Predicated region
        $region73: #{tpu_custom_call.1} parent=71 // pred_check
          %p496 = pneg %p111
        $region74: #{tpu_custom_call.1} parent=71 // pred_check_branch
          %498 = sbr.rel (%p496) target = $region76
        $region75: #{tpu_custom_call.1} parent=71 // pred_region
          %499 = dma.done [#allocation5], 16
        $region76: #{tpu_custom_call.1} parent=71 // pred_fallthru
          _
        // Predicated region
        $region77: #{tpu_custom_call.1} parent=71 // pred_check
          %p500 = pneg %p153
        $region78: #{tpu_custom_call.1} parent=71 // pred_check_branch
          %502 = sbr.rel (%p500) target = $region80
        $region79: #{tpu_custom_call.1} parent=71 // pred_region
          %503 = dma.done [#allocation8], 16
        $region80: #{tpu_custom_call.1} parent=71 // pred_fallthru
          _
        // Predicated region
        $region81: #{tpu_custom_call.1} parent=71 // pred_check
          %p504 = pneg %p174
        $region82: #{tpu_custom_call.1} parent=71 // pred_check_branch
          %506 = sbr.rel (%p504) target = $region84
        $region83: #{tpu_custom_call.1} parent=71 // pred_region
          %507 = dma.done [#allocation8], 16
        $region84: #{tpu_custom_call.1} parent=71 // pred_fallthru
          _
        // Predicated region
        $region85: #{tpu_custom_call.1} parent=71 // pred_check
          %p508 = pneg %p195
        $region86: #{tpu_custom_call.1} parent=71 // pred_check_branch
          %510 = sbr.rel (%p508) target = $region88
        $region87: #{tpu_custom_call.1} parent=71 // pred_region
          %511 = dma.done [#allocation11], 16
        $region88: #{tpu_custom_call.1} parent=71 // pred_fallthru
          _
        // Predicated region
        $region89: #{tpu_custom_call.1} parent=71 // pred_check
          %p512 = pneg %p216
        $region90: #{tpu_custom_call.1} parent=71 // pred_check_branch
          %514 = sbr.rel (%p512) target = $region92
        $region91: #{tpu_custom_call.1} parent=71 // pred_region
          %515 = dma.done [#allocation11], 256
        $region92: #{tpu_custom_call.1} parent=71 // pred_fallthru
          _
        // Predicated region
        $region93: #{tpu_custom_call.1} parent=71 // pred_check
          %p516 = pneg %p237
        $region94: #{tpu_custom_call.1} parent=71 // pred_check_branch
          %518 = sbr.rel (%p516) target = $region96
        $region95: #{tpu_custom_call.1} parent=71 // pred_region
          %519 = dma.done [#allocation14], 16
        $region96: #{tpu_custom_call.1} parent=71 // pred_fallthru
          _
        %p520 = scmp.lt.s32.totalorder %s40, 1
        %s521 = scalar_select %p520, %s40, 1
        %s522 = smul.addr %s521, 8
        %s523 = scalar_lea.vmem %s0, %s522
        %p524 = pneg %p69
        %p525 = pneg %p66
        %p526 = pneg %p90
        %p527 = pneg %p87
        %p528 = pneg %p111
        %p529 = pneg %p108
        %p530 = pneg %p132
        %p531 = pneg %p129
        %p532 = pneg %p153
        %p533 = pneg %p150
        %p534 = pneg %p174
        %p535 = pneg %p171
        %p536 = pneg %p195
        %p537 = pneg %p192
        %p538 = pneg %p216
        %p539 = pneg %p213
        %p540 = pneg %p237
        %p541 = pneg %p234
        %p542 = pneg %p258
        %p543 = pneg %p255
        %p544 = pneg %p279
        %p545 = pneg %p276
        %p546 = pneg %p300
        %p547 = pneg %p297
        %p548 = pneg %p321
        %p549 = pneg %p318
        %p550 = pneg %p349
        %p551 = pneg %p346
        %s552 = sand.u32 %s336, 1
        %s553 = scalar_lea.sflag [#allocation6], %s552
        %s554 = sand.u32 %s336, 1
        %s555 = smul.addr %s554, 8
        %s556 = scalar_lea.vmem [#allocation15], %s555
        %p557 = pneg %p377
        %p558 = pneg %p374
        %s559 = sand.u32 %s364, 1
        %s560 = scalar_lea.sflag [#allocation17], %s559
        %s561 = sand.u32 %s364, 1
        %s562 = smul.addr %s561, 8
        %s563 = scalar_lea.vmem [#allocation16], %s562
        %p564 = scmp.lt.s32.totalorder %s40, 1
        %s565 = scalar_select %p564, %s40, 1
        %s566 = smul.addr %s565, 8
        %s567 = scalar_lea.vmem %s0, %s566
        %s569 = smul.u32 %s41, 8
        %p570 = scmp.eq.s32.totalorder %s41, 0
        // Predicated region
        $region97: #{tpu_custom_call.1} parent=71 // pred_check
          %p571 = pneg %p570
        $region98: #{tpu_custom_call.1} parent=71 // pred_check_branch
          %573 = sbr.rel (%p571) target = $region100
        $region99: #{tpu_custom_call.1} parent=71 // pred_region
          %v574 = vld [vmem:[%s567] sm:$0xff]
          %v575 = vld [vmem:[#allocation9] sm:$0x1]
          %v576 = vld [vmem:[#allocation10] sm:$0x1]
          %vm577 = vcmask 261120
          %v578 = vsel %vm577, %v574, 0.0
          %579 = vadd.xlane.f32.xlu0 %v578
          %v580 = vpop.xlane.xlu0 %579
          %v581 = vrcp.pop 32.0
          %v582 = vmul.f32 %v580, %v581
          %v583 = vsub.f32 %v574, %v582
          %v584 = vmul.f32 %v583, %v583
          %v585 = vsel %vm577, %v584, 0.0
          %586 = vadd.xlane.f32.xlu0 %v585
          %v587 = vpop.xlane.xlu0 %586
          %v588 = vmul.f32 %v587, %v581
          %v589 = vadd.f32 %v588, 1e-05
          %v590 = vrsqrt.pop %v589
          %v591 = vmul.f32 %v583, %v590
          %v593 = vlaneseq
          %v594 = vshrl.u32 %v593, 7
          %v595 = vsub.s32 0, %v594
          %v596 = vrot.slane %v575, %v595
          %v598 = vmul.f32 %v591, %v596
          %v600 = vlaneseq
          %v601 = vshrl.u32 %v600, 7
          %v602 = vsub.s32 0, %v601
          %v603 = vrot.slane %v576, %v602
          %v605 = vadd.f32 %v598, %v603
          %v606 = vpack.c.bf16 %v605, %v605
          %v607 = vld [vmem:[%s1] sm:$0xf]
          %v608 = vld [vmem:[%s1 + $0x4] sm:$0xf]
          %v609 = vld [vmem:[%s1 + $0x8] sm:$0xf]
          %v610 = vld [vmem:[%s1 + $0xc] sm:$0xf]
          %v611 = vld [vmem:[#allocation4] sm:$0x1]
          %v613 = vlaneseq
          %v614 = vshrl.u32 %v613, 7
          %v615 = vsub.s32 0, %v614
          %v616 = vrot.slane %v611, %v615
          %v622 = vunpack.c.l.b16 %v607
          %v623 = vunpack.c.l.b16 %v608
          %v624 = vunpack.c.l.b16 %v609
          %v625 = vunpack.c.l.b16 %v610
          %v626 = vpack.c.b16 %v623, %v622
          %v627 = vpack.c.b16 %v625, %v624
          %v631 = vsel %vm577, %v606, 0
          %633 = vmatprep.subr.bf16.mxu0 0
          %634 = vmatpush1.bf16.msra.mxu0 0
          %635 = vmatprep.subr.bf16.mxu0 0
          %636 = vmatpush1.bf16.msra.mxu0 0
          %637 = vmatprep.subr.bf16.mxu0 0
          %638 = vmatpush1.bf16.msra.mxu0 0
          %639 = vmatprep.subr.bf16.mxu0 0
          %640 = vmatpush1.bf16.msra.mxu0 0
          %641 = vmatprep.subr.bf16.mxu0 0
          %642 = vmatpush1.bf16.msra.mxu0 0
          %643 = vmatprep.subr.bf16.mxu0 0
          %644 = vmatpush1.bf16.msra.mxu0 0
          %645 = vmatprep.subr.bf16.mxu0 0
          %646 = vmatpush1.bf16.msra.mxu0 %v627
          %647 = vmatprep.subr.bf16.mxu0 0
          %648 = vmatpush1.bf16.msra.mxu0 %v626
          %649 = vmatprep.subr.bf16.mxu0 0
          %650 = vmatpush2.bf16.msra.mxu0 0
          %651 = vmatprep.subr.bf16.mxu0 0
          %652 = vmatpush2.bf16.msra.mxu0 0
          %653 = vmatprep.subr.bf16.mxu0 0
          %654 = vmatpush2.bf16.msra.mxu0 0
          %655 = vmatprep.subr.bf16.mxu0 0
          %656 = vmatpush2.bf16.msra.mxu0 0
          %657 = vmatprep.subr.bf16.mxu0 0
          %658 = vmatpush2.bf16.msra.mxu0 0
          %659 = vmatprep.subr.bf16.mxu0 0
          %660 = vmatpush2.bf16.msra.mxu0 0
          %661 = vmatprep.subr.bf16.mxu0 0
          %662 = vmatpush2.bf16.msra.mxu0 0
          %663 = vmatprep.subr.bf16.mxu0 0
          %664 = vmatpush2.bf16.msra.mxu0 0
          %665 = vmatprep.mubr.bf16.mxu0 0
          %666 = vmatmul.mubr.bf16.gmra.mxu0 %v631
          %v667 = vpop.f32.mrf.mxu0
          %v668 = vadd.f32 %v616, %v667
          %v669 = vpop.f32.mrf.mxu0
          %v670 = vpop.f32.mrf.mxu0
          %v671 = vpop.f32.mrf.mxu0
          %672 = vdwg.mxu0
          %v673 = vpack.c.bf16 %v668, %v668
          %vm674 = vcmask 781312
          %675 = vst.msk [vmem:[#allocation2] sm:$0xf] %vm674, %v673
        $region100: #{tpu_custom_call.1} parent=71 // pred_fallthru
          _
        %s676 = scalar_lea.vmem %s567, %s569
        %v677 = vld [vmem:[%s676] sm:$0xff]
        %s678 = sshra.s32 %s569, 3
        %s679 = sand.u32 %s569, 7
        %s680 = smul.addr %s678, 4
        %s681 = scalar_lea.vmem [#allocation2], %s680
        %v682 = vld [vmem:[%s681] sm:$0xf]
        %v683 = vld [vmem:[#allocation2] sm:$0xf]
        %v685 = vunpack.c.l.b16 %v683
        %v686 = vpack.c.b16 %v685, %v685
        %687 = vrot.lane.b32.xlu0 %v686, 96
        %v688 = vpop.permute.xlu0 %687
        %vm689 = vcmask 130048
        %v691 = vsel %vm689, %v682, 0
        %v694 = vsel %vm689, %v688, 0
        %696 = vmatprep.subr.bf16.mxu0 0
        %697 = vmatpush1.bf16.xpose.msra.mxu0 0
        %698 = vmatprep.subr.bf16.mxu0 0
        %699 = vmatpush1.bf16.xpose.msra.mxu0 0
        %700 = vmatprep.subr.bf16.mxu0 0
        %701 = vmatpush1.bf16.xpose.msra.mxu0 0
        %702 = vmatprep.subr.bf16.mxu0 0
        %703 = vmatpush1.bf16.xpose.msra.mxu0 0
        %704 = vmatprep.subr.bf16.mxu0 0
        %705 = vmatpush1.bf16.xpose.msra.mxu0 0
        %706 = vmatprep.subr.bf16.mxu0 0
        %707 = vmatpush1.bf16.xpose.msra.mxu0 0
        %708 = vmatprep.subr.bf16.mxu0 0
        %709 = vmatpush1.bf16.xpose.msra.mxu0 0
        %710 = vmatprep.subr.bf16.mxu0 0
        %711 = vmatpush1.bf16.xpose.msra.mxu0 %v694
        %712 = vmatprep.subr.bf16.mxu0 0
        %713 = vmatpush2.bf16.xpose.msra.mxu0 0
        %714 = vmatprep.subr.bf16.mxu0 0
        %715 = vmatpush2.bf16.xpose.msra.mxu0 0
        %716 = vmatprep.subr.bf16.mxu0 0
        %717 = vmatpush2.bf16.xpose.msra.mxu0 0
        %718 = vmatprep.subr.bf16.mxu0 0
        %719 = vmatpush2.bf16.xpose.msra.mxu0 0
        %720 = vmatprep.subr.bf16.mxu0 0
        %721 = vmatpush2.bf16.xpose.msra.mxu0 0
        %722 = vmatprep.subr.bf16.mxu0 0
        %723 = vmatpush2.bf16.xpose.msra.mxu0 0
        %724 = vmatprep.subr.bf16.mxu0 0
        %725 = vmatpush2.bf16.xpose.msra.mxu0 0
        %726 = vmatprep.subr.bf16.mxu0 0
        %727 = vmatpush2.bf16.xpose.msra.mxu0 0
        %728 = vmatprep.mubr.bf16.mxu0 0
        %729 = vmatmul.mubr.bf16.gmra.mxu0 %v691
        %v730 = vpop.f32.mrf.mxu0
        %v731 = vadd.f32 0.0, %v730
        %v732 = vpop.f32.mrf.mxu0
        %v733 = vpop.f32.mrf.mxu0
        %v734 = vpop.f32.mrf.mxu0
        %735 = vdwg.mxu0
        %vm736 = vcmask 64512
        %v737 = vsel %vm736, %v731, -inf
        %738 = vmax.xlane.f32.xlu0 %v737
        %v739 = vpop.xlane.xlu0 %738
        %v740 = vsub.f32 %v731, %v739
        %v741 = vmul.f32 %v740, 1.442695
        %v742 = vpow.pop %v741
        %v743 = vsel %vm736, %v742, 0.0
        %744 = vadd.xlane.f32.xlu0 %v743
        %v745 = vpop.xlane.xlu0 %744
        %v746 = vrcp.pop %v745
        %v747 = vmul.f32 %v742, %v746
        %v748 = vpack.c.bf16 %v747, %v747
        %vm749 = vcmask 60416
        %750 = vst.msk [vmem:[%s563] sm:$0xf] %vm749, %v748
        %751 = vrot.lane.b32.xlu0 %v686, 64
        %v752 = vpop.permute.xlu0 %751
        %v754 = vsel %vm736, %v748, 0
        %vm756 = vcmask 1043456
        %v758 = vsel %vm756, %v752, 0
        %760 = vmatprep.subr.bf16.mxu0 0
        %761 = vmatpush1.bf16.msra.mxu0 0
        %762 = vmatprep.subr.bf16.mxu0 0
        %763 = vmatpush1.bf16.msra.mxu0 0
        %764 = vmatprep.subr.bf16.mxu0 0
        %765 = vmatpush1.bf16.msra.mxu0 0
        %766 = vmatprep.subr.bf16.mxu0 0
        %767 = vmatpush1.bf16.msra.mxu0 0
        %768 = vmatprep.subr.bf16.mxu0 0
        %769 = vmatpush1.bf16.msra.mxu0 0
        %770 = vmatprep.subr.bf16.mxu0 0
        %771 = vmatpush1.bf16.msra.mxu0 0
        %772 = vmatprep.subr.bf16.mxu0 0
        %773 = vmatpush1.bf16.msra.mxu0 0
        %774 = vmatprep.subr.bf16.mxu0 0
        %775 = vmatpush1.bf16.msra.mxu0 %v758
        %776 = vmatprep.subr.bf16.mxu0 0
        %777 = vmatpush2.bf16.msra.mxu0 0
        %778 = vmatprep.subr.bf16.mxu0 0
        %779 = vmatpush2.bf16.msra.mxu0 0
        %780 = vmatprep.subr.bf16.mxu0 0
        %781 = vmatpush2.bf16.msra.mxu0 0
        %782 = vmatprep.subr.bf16.mxu0 0
        %783 = vmatpush2.bf16.msra.mxu0 0
        %784 = vmatprep.subr.bf16.mxu0 0
        %785 = vmatpush2.bf16.msra.mxu0 0
        %786 = vmatprep.subr.bf16.mxu0 0
        %787 = vmatpush2.bf16.msra.mxu0 0
        %788 = vmatprep.subr.bf16.mxu0 0
        %789 = vmatpush2.bf16.msra.mxu0 0
        %790 = vmatprep.subr.bf16.mxu0 0
        %791 = vmatpush2.bf16.msra.mxu0 0
        %792 = vmatprep.mubr.bf16.mxu0 0
        %793 = vmatmul.mubr.bf16.gmra.mxu0 %v754
        %v794 = vpop.f32.mrf.mxu0
        %v795 = vadd.f32 0.0, %v794
        %v796 = vpop.f32.mrf.mxu0
        %v797 = vpop.f32.mrf.mxu0
        %v798 = vpop.f32.mrf.mxu0
        %799 = vdwg.mxu0
        %v800 = vpack.c.bf16 %v795, %v795
        %vm801 = vcmask 125952
        %802 = vst.msk [vmem:[#allocation3] sm:$0xf] %vm801, %v800
        %v803 = vld [vmem:[#allocation2] sm:$0xf]
        %v805 = vunpack.c.l.b16 %v682
        %v806 = vpack.c.b16 %v805, %v805
        %807 = vrot.lane.b32.xlu0 %v806, 112
        %v808 = vpop.permute.xlu0 %807
        %v810 = vunpack.c.l.b16 %v803
        %v811 = vpack.c.b16 %v810, %v810
        %812 = vrot.lane.b32.xlu0 %v811, 80
        %v813 = vpop.permute.xlu0 %812
        %v815 = vsel %vm689, %v808, 0
        %v818 = vsel %vm689, %v813, 0
        %820 = vmatprep.subr.bf16.mxu0 0
        %821 = vmatpush1.bf16.xpose.msra.mxu0 0
        %822 = vmatprep.subr.bf16.mxu0 0
        %823 = vmatpush1.bf16.xpose.msra.mxu0 0
        %824 = vmatprep.subr.bf16.mxu0 0
        %825 = vmatpush1.bf16.xpose.msra.mxu0 0
        %826 = vmatprep.subr.bf16.mxu0 0
        %827 = vmatpush1.bf16.xpose.msra.mxu0 0
        %828 = vmatprep.subr.bf16.mxu0 0
        %829 = vmatpush1.bf16.xpose.msra.mxu0 0
        %830 = vmatprep.subr.bf16.mxu0 0
        %831 = vmatpush1.bf16.xpose.msra.mxu0 0
        %832 = vmatprep.subr.bf16.mxu0 0
        %833 = vmatpush1.bf16.xpose.msra.mxu0 0
        %834 = vmatprep.subr.bf16.mxu0 0
        %835 = vmatpush1.bf16.xpose.msra.mxu0 %v818
        %836 = vmatprep.subr.bf16.mxu0 0
        %837 = vmatpush2.bf16.xpose.msra.mxu0 0
        %838 = vmatprep.subr.bf16.mxu0 0
        %839 = vmatpush2.bf16.xpose.msra.mxu0 0
        %840 = vmatprep.subr.bf16.mxu0 0
        %841 = vmatpush2.bf16.xpose.msra.mxu0 0
        %842 = vmatprep.subr.bf16.mxu0 0
        %843 = vmatpush2.bf16.xpose.msra.mxu0 0
        %844 = vmatprep.subr.bf16.mxu0 0
        %845 = vmatpush2.bf16.xpose.msra.mxu0 0
        %846 = vmatprep.subr.bf16.mxu0 0
        %847 = vmatpush2.bf16.xpose.msra.mxu0 0
        %848 = vmatprep.subr.bf16.mxu0 0
        %849 = vmatpush2.bf16.xpose.msra.mxu0 0
        %850 = vmatprep.subr.bf16.mxu0 0
        %851 = vmatpush2.bf16.xpose.msra.mxu0 0
        %852 = vmatprep.mubr.bf16.mxu0 0
        %853 = vmatmul.mubr.bf16.gmra.mxu0 %v815
        %v854 = vpop.f32.mrf.mxu0
        %v855 = vadd.f32 0.0, %v854
        %v856 = vpop.f32.mrf.mxu0
        %v857 = vpop.f32.mrf.mxu0
        %v858 = vpop.f32.mrf.mxu0
        %859 = vdwg.mxu0
        %v860 = vsel %vm736, %v855, -inf
        %861 = vmax.xlane.f32.xlu0 %v860
        %v862 = vpop.xlane.xlu0 %861
        %v863 = vsub.f32 %v855, %v862
        %v864 = vmul.f32 %v863, 1.442695
        %v865 = vpow.pop %v864
        %v866 = vsel %vm736, %v865, 0.0
        %867 = vadd.xlane.f32.xlu0 %v866
        %v868 = vpop.xlane.xlu0 %867
        %v869 = vrcp.pop %v868
        %v870 = vmul.f32 %v865, %v869
        %v871 = vpack.c.bf16 %v870, %v870
        %s872 = scalar_lea.vmem %s563, 4 [#allocation16]
        %873 = vst.msk [vmem:[%s872] sm:$0xf] %vm749, %v871
        %874 = vrot.lane.b32.xlu0 %v811, 48
        %v875 = vpop.permute.xlu0 %874
        %v877 = vsel %vm736, %v871, 0
        %v880 = vsel %vm756, %v875, 0
        %882 = vmatprep.subr.bf16.mxu0 0
        %883 = vmatpush1.bf16.msra.mxu0 0
        %884 = vmatprep.subr.bf16.mxu0 0
        %885 = vmatpush1.bf16.msra.mxu0 0
        %886 = vmatprep.subr.bf16.mxu0 0
        %887 = vmatpush1.bf16.msra.mxu0 0
        %888 = vmatprep.subr.bf16.mxu0 0
        %889 = vmatpush1.bf16.msra.mxu0 0
        %890 = vmatprep.subr.bf16.mxu0 0
        %891 = vmatpush1.bf16.msra.mxu0 0
        %892 = vmatprep.subr.bf16.mxu0 0
        %893 = vmatpush1.bf16.msra.mxu0 0
        %894 = vmatprep.subr.bf16.mxu0 0
        %895 = vmatpush1.bf16.msra.mxu0 0
        %896 = vmatprep.subr.bf16.mxu0 0
        %897 = vmatpush1.bf16.msra.mxu0 %v880
        %898 = vmatprep.subr.bf16.mxu0 0
        %899 = vmatpush2.bf16.msra.mxu0 0
        %900 = vmatprep.subr.bf16.mxu0 0
        %901 = vmatpush2.bf16.msra.mxu0 0
        %902 = vmatprep.subr.bf16.mxu0 0
        %903 = vmatpush2.bf16.msra.mxu0 0
        %904 = vmatprep.subr.bf16.mxu0 0
        %905 = vmatpush2.bf16.msra.mxu0 0
        %906 = vmatprep.subr.bf16.mxu0 0
        %907 = vmatpush2.bf16.msra.mxu0 0
        %908 = vmatprep.subr.bf16.mxu0 0
        %909 = vmatpush2.bf16.msra.mxu0 0
        %910 = vmatprep.subr.bf16.mxu0 0
        %911 = vmatpush2.bf16.msra.mxu0 0
        %912 = vmatprep.subr.bf16.mxu0 0
        %913 = vmatpush2.bf16.msra.mxu0 0
        %914 = vmatprep.mubr.bf16.mxu0 0
        %915 = vmatmul.mubr.bf16.gmra.mxu0 %v877
        %v916 = vpop.f32.mrf.mxu0
        %v917 = vadd.f32 0.0, %v916
        %v918 = vpop.f32.mrf.mxu0
        %v919 = vpop.f32.mrf.mxu0
        %v920 = vpop.f32.mrf.mxu0
        %921 = vdwg.mxu0
        %v922 = vpack.c.bf16 %v917, %v917
        %v924 = vunpack.c.l.b16 %v922
        %v925 = vpack.c.b16 %v924, %v924
        %926 = vrot.lane.b32.xlu0 %v925, 16
        %v927 = vpop.permute.xlu0 %926
        %vm929 = vcmask 257152
        %930 = vst.msk [vmem:[#allocation3] sm:$0xf] %vm929, %v927
        %v931 = vld [vmem:[#allocation3] sm:$0xf]
        %v932 = vld [vmem:[%s3] sm:$0xf]
        %v933 = vld [vmem:[%s3 + $0x4] sm:$0xf]
        %v934 = vld [vmem:[%s3 + $0x8] sm:$0xf]
        %v935 = vld [vmem:[%s3 + $0xc] sm:$0xf]
        %v936 = vld [vmem:[#allocation7] sm:$0x1]
        %v938 = vlaneseq
        %v939 = vshrl.u32 %v938, 7
        %v940 = vsub.s32 0, %v939
        %v941 = vrot.slane %v936, %v940
        %v947 = vunpack.c.l.b16 %v932
        %v948 = vunpack.c.l.b16 %v933
        %v949 = vunpack.c.l.b16 %v934
        %v950 = vunpack.c.l.b16 %v935
        %v951 = vpack.c.b16 %v948, %v947
        %v952 = vpack.c.b16 %v950, %v949
        %vm955 = vcmask 261120
        %v957 = vsel %vm955, %v931, 0
        %959 = vmatprep.subr.bf16.mxu0 0
        %960 = vmatpush1.bf16.msra.mxu0 0
        %961 = vmatprep.subr.bf16.mxu0 0
        %962 = vmatpush1.bf16.msra.mxu0 0
        %963 = vmatprep.subr.bf16.mxu0 0
        %964 = vmatpush1.bf16.msra.mxu0 0
        %965 = vmatprep.subr.bf16.mxu0 0
        %966 = vmatpush1.bf16.msra.mxu0 0
        %967 = vmatprep.subr.bf16.mxu0 0
        %968 = vmatpush1.bf16.msra.mxu0 0
        %969 = vmatprep.subr.bf16.mxu0 0
        %970 = vmatpush1.bf16.msra.mxu0 0
        %971 = vmatprep.subr.bf16.mxu0 0
        %972 = vmatpush1.bf16.msra.mxu0 %v952
        %973 = vmatprep.subr.bf16.mxu0 0
        %974 = vmatpush1.bf16.msra.mxu0 %v951
        %975 = vmatprep.subr.bf16.mxu0 0
        %976 = vmatpush2.bf16.msra.mxu0 0
        %977 = vmatprep.subr.bf16.mxu0 0
        %978 = vmatpush2.bf16.msra.mxu0 0
        %979 = vmatprep.subr.bf16.mxu0 0
        %980 = vmatpush2.bf16.msra.mxu0 0
        %981 = vmatprep.subr.bf16.mxu0 0
        %982 = vmatpush2.bf16.msra.mxu0 0
        %983 = vmatprep.subr.bf16.mxu0 0
        %984 = vmatpush2.bf16.msra.mxu0 0
        %985 = vmatprep.subr.bf16.mxu0 0
        %986 = vmatpush2.bf16.msra.mxu0 0
        %987 = vmatprep.subr.bf16.mxu0 0
        %988 = vmatpush2.bf16.msra.mxu0 0
        %989 = vmatprep.subr.bf16.mxu0 0
        %990 = vmatpush2.bf16.msra.mxu0 0
        %991 = vmatprep.mubr.bf16.mxu0 0
        %992 = vmatmul.mubr.bf16.gmra.mxu0 %v957
        %v993 = vpop.f32.mrf.mxu0
        %v994 = vadd.f32 %v941, %v993
        %v995 = vpop.f32.mrf.mxu0
        %v996 = vpop.f32.mrf.mxu0
        %v997 = vpop.f32.mrf.mxu0
        %998 = vdwg.mxu0
        %v999 = vadd.f32 %v994, %v677
        %v1000 = vld [vmem:[%s11] sm:$0x1]
        %v1001 = vld [vmem:[%s12] sm:$0x1]
        %v1002 = vsel %vm955, %v999, 0.0
        %1003 = vadd.xlane.f32.xlu0 %v1002
        %v1004 = vpop.xlane.xlu0 %1003
        %v1005 = vrcp.pop 32.0
        %v1006 = vmul.f32 %v1004, %v1005
        %v1007 = vsub.f32 %v999, %v1006
        %v1008 = vmul.f32 %v1007, %v1007
        %v1009 = vsel %vm955, %v1008, 0.0
        %1010 = vadd.xlane.f32.xlu0 %v1009
        %v1011 = vpop.xlane.xlu0 %1010
        %v1012 = vmul.f32 %v1011, %v1005
        %v1013 = vadd.f32 %v1012, 1e-05
        %v1014 = vrsqrt.pop %v1013
        %v1015 = vmul.f32 %v1007, %v1014
        %v1017 = vlaneseq
        %v1018 = vshrl.u32 %v1017, 7
        %v1019 = vsub.s32 0, %v1018
        %v1020 = vrot.slane %v1000, %v1019
        %v1022 = vmul.f32 %v1015, %v1020
        %v1024 = vlaneseq
        %v1025 = vshrl.u32 %v1024, 7
        %v1026 = vsub.s32 0, %v1025
        %v1027 = vrot.slane %v1001, %v1026
        %v1029 = vadd.f32 %v1022, %v1027
        %v1030 = vpack.c.bf16 %v1029, %v1029
        %v1031 = vld [vmem:[#allocation12] sm:$0xf]
        %v1032 = vld [vmem:[#allocation12 + $0x4] sm:$0xf]
        %v1033 = vld [vmem:[#allocation12 + $0x8] sm:$0xf]
        %v1034 = vld [vmem:[#allocation12 + $0xc] sm:$0xf]
        %v1035 = vld [vmem:[#allocation13] sm:$0x1]
        %v1037 = vlaneseq
        %v1038 = vshrl.u32 %v1037, 7
        %v1039 = vsub.s32 0, %v1038
        %v1040 = vrot.slane %v1035, %v1039
        %v1046 = vunpack.c.l.b16 %v1031
        %v1047 = vunpack.c.l.b16 %v1032
        %v1048 = vunpack.c.l.b16 %v1033
        %v1049 = vunpack.c.l.b16 %v1034
        %v1050 = vpack.c.b16 %v1047, %v1046
        %v1051 = vpack.c.b16 %v1049, %v1048
        %v1055 = vsel %vm955, %v1030, 0
        %1057 = vmatprep.subr.bf16.mxu0 0
        %1058 = vmatpush1.bf16.msra.mxu0 0
        %1059 = vmatprep.subr.bf16.mxu0 0
        %1060 = vmatpush1.bf16.msra.mxu0 0
        %1061 = vmatprep.subr.bf16.mxu0 0
        %1062 = vmatpush1.bf16.msra.mxu0 0
        %1063 = vmatprep.subr.bf16.mxu0 0
        %1064 = vmatpush1.bf16.msra.mxu0 0
        %1065 = vmatprep.subr.bf16.mxu0 0
        %1066 = vmatpush1.bf16.msra.mxu0 0
        %1067 = vmatprep.subr.bf16.mxu0 0
        %1068 = vmatpush1.bf16.msra.mxu0 0
        %1069 = vmatprep.subr.bf16.mxu0 0
        %1070 = vmatpush1.bf16.msra.mxu0 %v1051
        %1071 = vmatprep.subr.bf16.mxu0 0
        %1072 = vmatpush1.bf16.msra.mxu0 %v1050
        %1073 = vmatprep.subr.bf16.mxu0 0
        %1074 = vmatpush2.bf16.msra.mxu0 0
        %1075 = vmatprep.subr.bf16.mxu0 0
        %1076 = vmatpush2.bf16.msra.mxu0 0
        %1077 = vmatprep.subr.bf16.mxu0 0
        %1078 = vmatpush2.bf16.msra.mxu0 0
        %1079 = vmatprep.subr.bf16.mxu0 0
        %1080 = vmatpush2.bf16.msra.mxu0 0
        %1081 = vmatprep.subr.bf16.mxu0 0
        %1082 = vmatpush2.bf16.msra.mxu0 0
        %1083 = vmatprep.subr.bf16.mxu0 0
        %1084 = vmatpush2.bf16.msra.mxu0 0
        %1085 = vmatprep.subr.bf16.mxu0 0
        %1086 = vmatpush2.bf16.msra.mxu0 0
        %1087 = vmatprep.subr.bf16.mxu0 0
        %1088 = vmatpush2.bf16.msra.mxu0 0
        %1089 = vmatprep.mubr.bf16.mxu0 0
        %1090 = vmatmul.mubr.bf16.gmra.mxu0 %v1055
        %v1091 = vpop.f32.mrf.mxu0
        %v1092 = vadd.f32 %v1040, %v1091
        %v1093 = vpop.f32.mrf.mxu0
        %v1094 = vpop.f32.mrf.mxu0
        %v1095 = vpop.f32.mrf.mxu0
        %1096 = vdwg.mxu0
        %v1097 = vmax.f32 %v1092, 0.0
        %v1098 = vpack.c.bf16 %v1097, %v1097
        %v1099 = vld [vmem:[%s9] sm:$0xf]
        %v1100 = vld [vmem:[%s9 + $0x4] sm:$0xf]
        %v1101 = vld [vmem:[%s9 + $0x8] sm:$0xf]
        %v1102 = vld [vmem:[%s9 + $0xc] sm:$0xf]
        %v1103 = vld [vmem:[%s9 + $0x10] sm:$0xf]
        %v1104 = vld [vmem:[%s9 + $0x14] sm:$0xf]
        %v1105 = vld [vmem:[%s9 + $0x18] sm:$0xf]
        %v1106 = vld [vmem:[%s9 + $0x1c] sm:$0xf]
        %v1107 = vld [vmem:[%s10] sm:$0x1]
        %v1109 = vlaneseq
        %v1110 = vshrl.u32 %v1109, 7
        %v1111 = vsub.s32 0, %v1110
        %v1112 = vrot.slane %v1107, %v1111
        %v1122 = vunpack.c.l.b16 %v1099
        %v1123 = vunpack.c.l.b16 %v1100
        %v1124 = vunpack.c.l.b16 %v1101
        %v1125 = vunpack.c.l.b16 %v1102
        %v1126 = vunpack.c.l.b16 %v1103
        %v1127 = vunpack.c.l.b16 %v1104
        %v1128 = vunpack.c.l.b16 %v1105
        %v1129 = vunpack.c.l.b16 %v1106
        %v1130 = vpack.c.b16 %v1123, %v1122
        %v1131 = vpack.c.b16 %v1125, %v1124
        %v1132 = vpack.c.b16 %v1127, %v1126
        %v1133 = vpack.c.b16 %v1129, %v1128
        %vm1138 = vcmask 523264
        %v1140 = vsel %vm1138, %v1098, 0
        %1142 = vmatprep.subr.bf16.mxu0 0
        %1143 = vmatpush1.bf16.msra.mxu0 0
        %1144 = vmatprep.subr.bf16.mxu0 0
        %1145 = vmatpush1.bf16.msra.mxu0 0
        %1146 = vmatprep.subr.bf16.mxu0 0
        %1147 = vmatpush1.bf16.msra.mxu0 0
        %1148 = vmatprep.subr.bf16.mxu0 0
        %1149 = vmatpush1.bf16.msra.mxu0 0
        %1150 = vmatprep.subr.bf16.mxu0 0
        %1151 = vmatpush1.bf16.msra.mxu0 %v1133
        %1152 = vmatprep.subr.bf16.mxu0 0
        %1153 = vmatpush1.bf16.msra.mxu0 %v1132
        %1154 = vmatprep.subr.bf16.mxu0 0
        %1155 = vmatpush1.bf16.msra.mxu0 %v1131
        %1156 = vmatprep.subr.bf16.mxu0 0
        %1157 = vmatpush1.bf16.msra.mxu0 %v1130
        %1158 = vmatprep.subr.bf16.mxu0 0
        %1159 = vmatpush2.bf16.msra.mxu0 0
        %1160 = vmatprep.subr.bf16.mxu0 0
        %1161 = vmatpush2.bf16.msra.mxu0 0
        %1162 = vmatprep.subr.bf16.mxu0 0
        %1163 = vmatpush2.bf16.msra.mxu0 0
        %1164 = vmatprep.subr.bf16.mxu0 0
        %1165 = vmatpush2.bf16.msra.mxu0 0
        %1166 = vmatprep.subr.bf16.mxu0 0
        %1167 = vmatpush2.bf16.msra.mxu0 0
        %1168 = vmatprep.subr.bf16.mxu0 0
        %1169 = vmatpush2.bf16.msra.mxu0 0
        %1170 = vmatprep.subr.bf16.mxu0 0
        %1171 = vmatpush2.bf16.msra.mxu0 0
        %1172 = vmatprep.subr.bf16.mxu0 0
        %1173 = vmatpush2.bf16.msra.mxu0 0
        %1174 = vmatprep.mubr.bf16.mxu0 0
        %1175 = vmatmul.mubr.bf16.gmra.mxu0 %v1140
        %v1176 = vpop.f32.mrf.mxu0
        %v1177 = vadd.f32 %v1112, %v1176
        %v1178 = vpop.f32.mrf.mxu0
        %v1179 = vpop.f32.mrf.mxu0
        %v1180 = vpop.f32.mrf.mxu0
        %1181 = vdwg.mxu0
        %v1182 = vadd.f32 %v1177, %v999
        %1183 = vst.msk [vmem:[%s556] sm:$0xff] %vm955, %v1182
        %s1184 = sand.u32 %s336, 1
        %s1185 = scalar_lea.sflag [#allocation6], %s1184
        %s1186 = sand.u32 %s336, 1
        %s1187 = smul.addr %s1186, 8
        %s1188 = scalar_lea.vmem [#allocation15], %s1187
        %s1189 = sand.u32 %s364, 1
        %s1190 = scalar_lea.sflag [#allocation17], %s1189
        %s1191 = sand.u32 %s364, 1
        %s1192 = smul.addr %s1191, 8
        %s1193 = scalar_lea.vmem [#allocation16], %s1192
        // Predicated region
        $region101: #{tpu_custom_call.1} parent=71 // pred_check
          %p1194 = pneg %p346
        $region102: #{tpu_custom_call.1} parent=71 // pred_check_branch
          %1196 = sbr.rel (%p1194) target = $region104
        $region103: #{tpu_custom_call.1} parent=71 // pred_region
          %s1198 = ssub.s32 128, 128
          %1199 = vsyncadd %s1185, %s1198
          %s1200 = sadd.s32 %s41, %s40
          %s1201 = smul.addr %s1200, 128
          %s1202 = scalar_lea.hbm %s13, %s1201
          %s1204 = sshll.u32 %s1188, 4
          %s1205 = int_to_ptr.vmem [resolvable:$true] %s1204
          %1207 = dma.vmem_to_hbm [thread:$0]  %s1205, 128, %s1202, %s1185
        $region104: #{tpu_custom_call.1} parent=71 // pred_fallthru
          _
        // Predicated region
        $region105: #{tpu_custom_call.1} parent=71 // pred_check
          %p1208 = pneg %p374
        $region106: #{tpu_custom_call.1} parent=71 // pred_check_branch
          %1210 = sbr.rel (%p1208) target = $region108
        $region107: #{tpu_custom_call.1} parent=71 // pred_region
          %s1212 = ssub.s32 128, 128
          %1213 = vsyncadd %s1190, %s1212
          %s1214 = smul.addr %s40, 2
          %s1215 = sadd.s32 %s41, %s1214
          %s1216 = smul.addr %s1215, 64
          %s1217 = scalar_lea.hbm %s14, %s1216
          %s1218 = sshll.u32 %s1193, 4
          %s1219 = int_to_ptr.vmem [resolvable:$true] %s1218
          %1224 = dma.vmem_to_hbm [thread:$0]  %s1219, 128, %s1217, %s1190, 64, 64, 4
        $region108: #{tpu_custom_call.1} parent=71 // pred_fallthru
          _
      $region72: #{tpu_custom_call.1} parent=5 // pred_fallthru
        _
      %p1225 = scmp.le.s32.totalorder 2, %s31
      // Predicated region
      $region109: #{tpu_custom_call.1} parent=5 // pred_check
        %p1226 = pneg %p1225
      $region110: #{tpu_custom_call.1} parent=5 // pred_check_branch
        %1228 = sbr.rel (%p1226) target = $region112
      $region111: #{tpu_custom_call.1} parent=5 // pred_region
        %s1229 = ssub.s32 %s31, 2
        // Predicated region
        $region113: #{tpu_custom_call.1} parent=111 // pred_check
          %p1230 = pneg %p352
        $region114: #{tpu_custom_call.1} parent=111 // pred_check_branch
          %1232 = sbr.rel (%p1230) target = $region116
        $region115: #{tpu_custom_call.1} parent=111 // pred_region
          %s1233 = sand.u32 %s337, 1
          %s1234 = scalar_lea.sflag [#allocation6], %s1233
          %s1235 = sand.u32 %s337, 1
          %s1236 = smul.addr %s1235, 8
          %s1237 = scalar_lea.vmem [#allocation15], %s1236
          %1238 = dma.done %s1234, 128
        $region116: #{tpu_custom_call.1} parent=111 // pred_fallthru
          _
        // Predicated region
        $region117: #{tpu_custom_call.1} parent=111 // pred_check
          %p1239 = pneg %p380
        $region118: #{tpu_custom_call.1} parent=111 // pred_check_branch
          %1241 = sbr.rel (%p1239) target = $region120
        $region119: #{tpu_custom_call.1} parent=111 // pred_region
          %s1242 = sand.u32 %s365, 1
          %s1243 = scalar_lea.sflag [#allocation17], %s1242
          %s1244 = sand.u32 %s365, 1
          %s1245 = smul.addr %s1244, 8
          %s1246 = scalar_lea.vmem [#allocation16], %s1245
          %1247 = dma.done %s1243, 128
        $region120: #{tpu_custom_call.1} parent=111 // pred_fallthru
          _
      $region112: #{tpu_custom_call.1} parent=5 // pred_fallthru
        _
    $region6: #{tpu_custom_call.1} parent=1 // loop_footer
      %s35 = sadd.s32 1, %s31
    $region7: #{tpu_custom_call.1} parent=1 // loop_footer_branch
      %30 = sbr.rel target = $region3
    $region8: #{tpu_custom_call.1} parent=1 // loop_exit
      _
    %1248 = vsyncpa [#allocation5], 1
    %s1249 = scalar_lea.sflag [#allocation5], 1
    %1250 = vsyncpa %s1249, 1
    %1251 = vsyncpa [#allocation8], 1
    %1252 = vsyncpa [#allocation11], 1
    %1253 = vsyncpa [#allocation14], 1
    %1254 = vsyncpa [#allocation6], 1
    %s1255 = scalar_lea.sflag [#allocation6], 1
    %1256 = vsyncpa %s1255, 1
    %1257 = vsyncpa [#allocation17], 1
    %s1258 = scalar_lea.sflag [#allocation17], 1
    %1259 = vsyncpa %s1258, 1

</llo_original>
